<compile_context>
chip_gen: v7x
topology: tpu7x:2x2x1
jax: 0.10.0
libtpu: 0.0.40
codegen_flags: <defaults>
</compile_context>

<pallas_src>
import jax
import jax.numpy as jnp
from jax import lax
from jax.experimental import pallas as pl
from jax.experimental.pallas import tpu as pltpu


def residual_cnn_kernel(xp_ref, w1_ref, t1_ref, w2r_ref, t2r_ref, o_ref):
    """One batch image per grid step.

    xp_ref : (1, H+2, W+2, Cin)  bf16  zero-padded input (halo for 3x3 convs)
    w1_ref : (9*Cin, Cp)         bf16  conv1 weights, BN1 scale folded, im2col rows
    t1_ref : (1, Cp)             f32   conv1 bias + BN1 shift (folded)
    w2r_ref: (9*Cout+Cin, Cp)    bf16  [conv2 | 1x1 resize] weights, BN2 folded
    t2r_ref: (1, Cp)             f32   conv2 bias + BN2 shift + resize bias
    o_ref  : (1, H*W, Cp)        f32   lane-dense output (Cp = Cout padded to 128)
    """
    cin = w1_ref.shape[0] // 9
    cout = (w2r_ref.shape[0] - cin) // 9
    h = xp_ref.shape[1] - 2
    w = xp_ref.shape[2] - 2
    m = h * w

    x4 = xp_ref[0]                                         # (H+2, W+2, Cin) bf16

    # --- conv1 (+ folded BN1) as a single im2col matmul: (M,9Cin)@(9Cin,Cp) ---
    p1 = jnp.concatenate(
        [x4[dy:dy + h, dx:dx + w, :].reshape(m, cin)
         for dy in range(3) for dx in range(3)], axis=-1)
    y1 = jnp.dot(p1, w1_ref[...], preferred_element_type=jnp.float32) + t1_ref[...]
    h1 = jnp.where(y1 > 0.0, y1, 0.01 * y1)                # LeakyReLU(0.01)
    # TODO(synk): Dropout(p=0.25) inside the block treated as identity (inference).

    # --- build the conv2 halo in-register (no scratch pad round trip) ---
    h1c = h1[:, :cout].astype(jnp.bfloat16).reshape(h, w, cout)
    zr = jnp.zeros((1, w, cout), jnp.bfloat16)
    zc = jnp.zeros((h + 2, 1, cout), jnp.bfloat16)
    h1p = jnp.concatenate([zr, h1c, zr], axis=0)
    h1p = jnp.concatenate([zc, h1p, zc], axis=1)           # (H+2, W+2, Cout)

    # --- conv2 + BN2 + 1x1 resize + residual fused into ONE matmul ---
    # columns = [9 shifted h1 patches | center x patch], K = 9*Cout + Cin
    p2 = jnp.concatenate(
        [h1p[dy:dy + h, dx:dx + w, :].reshape(m, cout)
         for dy in range(3) for dx in range(3)]
        + [x4[1:1 + h, 1:1 + w, :].reshape(m, cin)], axis=-1)
    y2 = jnp.dot(p2, w2r_ref[...], preferred_element_type=jnp.float32) + t2r_ref[...]

    # --- ReLU (final Dropout(p=0.25) = identity at inference), lane-dense store ---
    o_ref[...] = jnp.maximum(y2, 0.0).reshape(o_ref.shape)


def init_params(key, cin, cout):
    """Deterministic synthetic parameters matching the PyTorch module's shapes."""
    ks = jax.random.split(key, 12)
    p = {
        # PyTorch conv weight layout is (Cout, Cin, kh, kw)
        "w1": jax.random.normal(ks[0], (cout, cin, 3, 3), jnp.float32) * 0.1,
        "b1": jax.random.normal(ks[1], (cout,), jnp.float32) * 0.05,
        "w2": jax.random.normal(ks[2], (cout, cout, 3, 3), jnp.float32) * 0.1,
        "b2": jax.random.normal(ks[3], (cout,), jnp.float32) * 0.05,
        "wr": jax.random.normal(ks[4], (cout, cin, 1, 1), jnp.float32) * 0.1,
        "br": jax.random.normal(ks[5], (cout,), jnp.float32) * 0.05,
        # BatchNorm1 / BatchNorm2 parameters + running stats
        "g1": 1.0 + 0.1 * jax.random.normal(ks[6], (cout,), jnp.float32),
        "be1": 0.05 * jax.random.normal(ks[7], (cout,), jnp.float32),
        "m1": 0.05 * jax.random.normal(ks[8], (cout,), jnp.float32),
        "v1": 0.5 + jax.random.uniform(ks[9], (cout,), jnp.float32),
        "g2": 1.0 + 0.1 * jax.random.normal(ks[10], (cout,), jnp.float32),
        "be2": 0.05 * jax.random.normal(ks[11], (cout,), jnp.float32),
        "m2": 0.05 * jax.random.normal(ks[8], (cout,), jnp.float32) * 0.5,
        "v2": 0.5 + jax.random.uniform(ks[9], (cout,), jnp.float32) * 0.5,
    }
    return p


def _fold_bn(gamma, beta, mean, var, eps=1e-5):
    scale = gamma / jnp.sqrt(var + eps)
    shift = beta - mean * scale
    return scale, shift


def residual_cnn_forward(x_nchw, params):
    """NCHW -> NHWC, fold BN + biases into weights, one tiled pallas_call."""
    x = jnp.transpose(x_nchw, (0, 2, 3, 1)).astype(jnp.float32)      # NHWC
    n, h, w, cin = x.shape
    cout = params["w1"].shape[0]
    cpad = ((cout + 127) // 128) * 128        # lane-dense channel padding

    s1, t1 = _fold_bn(params["g1"], params["be1"], params["m1"], params["v1"])
    s2, t2 = _fold_bn(params["g2"], params["be2"], params["m2"], params["v2"])

    def pad_c(a):  # zero-pad output-channel axis (last) up to cpad lanes
        return jnp.pad(a, [(0, 0)] * (a.ndim - 1) + [(0, cpad - cout)])

    # Conv weights: PyTorch (Cout,Cin,kh,kw) -> HWIO, BN scale folded in,
    # flattened to im2col row order, output channels zero-padded to 128 lanes.
    w1 = jnp.transpose(params["w1"], (2, 3, 1, 0)) * s1              # (3,3,Cin,Cout)
    w1_eff = pad_c(w1.reshape(9 * cin, cout)).astype(jnp.bfloat16)
    t1_eff = pad_c((params["b1"] * s1 + t1).reshape(1, cout)).astype(jnp.float32)

    w2 = jnp.transpose(params["w2"], (2, 3, 1, 0)) * s2              # (3,3,Cout,Cout)
    wr = jnp.transpose(params["wr"][:, :, 0, 0], (1, 0))             # (Cin,Cout)
    w2r = pad_c(jnp.concatenate([w2.reshape(9 * cout, cout), wr], axis=0)
                ).astype(jnp.bfloat16)                               # (9Cout+Cin,Cp)
    t2r = pad_c((params["b2"] * s2 + t2 + params["br"]).reshape(1, cout)
                ).astype(jnp.float32)

    # pad=1 halo for the 3x3 convs; bf16 activations (f32 accumulation in-kernel).
    xp = jnp.pad(x, ((0, 0), (1, 1), (1, 1), (0, 0))).astype(jnp.bfloat16)

    # TODO(synk): for large H/W, additionally tile the row axis (1-row halo via
    # manual DMA) so per-step tiles stay within v7x's 64 MiB VMEM.
    out_flat = pl.pallas_call(
        residual_cnn_kernel,
        out_shape=jax.ShapeDtypeStruct((n, h * w, cpad), jnp.float32),
        grid=(n,),
        in_specs=[
            pl.BlockSpec((1, h + 2, w + 2, cin), lambda i: (i, 0, 0, 0)),
            pl.BlockSpec((9 * cin, cpad), lambda i: (0, 0)),
            pl.BlockSpec((1, cpad), lambda i: (0, 0)),
            pl.BlockSpec((9 * cout + cin, cpad), lambda i: (0, 0)),
            pl.BlockSpec((1, cpad), lambda i: (0, 0)),
        ],
        out_specs=pl.BlockSpec((1, h * w, cpad), lambda i: (i, 0, 0)),
        compiler_params=pltpu.CompilerParams(
            dimension_semantics=("parallel",),
            vmem_limit_bytes=32 * 1024 * 1024),
    )(xp, w1_eff, t1_eff, w2r, t2r)

    out = out_flat[:, :, :cout].reshape(n, h, w, cout)
    return jnp.transpose(out, (0, 3, 1, 2))                          # back to NCHW


def residual_cnn_reference(x_nchw, params):
    """Pure-JAX f32 reference (lax.conv) for correctness checking."""
    x = jnp.transpose(x_nchw, (0, 2, 3, 1)).astype(jnp.float32)
    dn = ("NHWC", "HWIO", "NHWC")

    def conv(inp, w, b, pad):
        return lax.conv_general_dilated(
            inp, w, (1, 1), [(pad, pad), (pad, pad)], dimension_numbers=dn) + b

    w1 = jnp.transpose(params["w1"], (2, 3, 1, 0))
    w2 = jnp.transpose(params["w2"], (2, 3, 1, 0))
    wr = jnp.transpose(params["wr"], (2, 3, 1, 0))
    s1, t1 = _fold_bn(params["g1"], params["be1"], params["m1"], params["v1"])
    s2, t2 = _fold_bn(params["g2"], params["be2"], params["m2"], params["v2"])

    y1 = conv(x, w1, params["b1"], 1) * s1 + t1
    h1 = jnp.where(y1 > 0, y1, 0.01 * y1)
    y2 = conv(h1, w2, params["b2"], 1) * s2 + t2
    res = conv(x, wr, params["br"], 0)
    out = jnp.maximum(y2 + res, 0.0)
    return jnp.transpose(out, (0, 3, 1, 2))


if __name__ == "__main__":
    key = jax.random.PRNGKey(0)
    k_x, k_p = jax.random.split(key)

    N, Cin, H, W = 2, 4, 16, 16
    Cout = 8

    x = jax.random.normal(k_x, (N, Cin, H, W), jnp.float32)   # PyTorch NCHW input
    params = init_params(k_p, Cin, Cout)

    out = jax.block_until_ready(residual_cnn_forward(x, params))
    ref = jax.block_until_ready(residual_cnn_reference(x, params))

    assert out.shape == (N, Cout, H, W), out.shape
    # bf16 matmul inputs (f32 accumulation) -> loosened tolerance vs f32 reference.
    if not bool(jnp.allclose(out, ref, atol=5e-2, rtol=5e-2)):
        raise AssertionError("Pallas kernel does not match JAX reference")

    print("KERNEL_OK")
</pallas_src>

<mosaic_0001>
module attributes {stable_mosaic.version = 11 : i64} {
  func.func @residual_cnn_kernel(%arg0: i32, %arg1: memref<1x18x18x4xbf16, #tpu.memory_space<vmem>>, %arg2: memref<36x128xbf16, #tpu.memory_space<vmem>>, %arg3: memref<1x128xf32, #tpu.memory_space<vmem>>, %arg4: memref<76x128xbf16, #tpu.memory_space<vmem>>, %arg5: memref<1x128xf32, #tpu.memory_space<vmem>>, %arg6: memref<1x256x128xf32, #tpu.memory_space<vmem>>) attributes {dimension_semantics = [#tpu.dimension_semantics<parallel>], iteration_bounds = array<i64: 2>, scalar_prefetch = 0 : i64, scratch_operands = 0 : i64, tpu.core_type = #tpu.core_type<tc>, window_params = [{transform_indices = @transform_0, window_bounds = array<i64: 1, 18, 18, 4>}, {pipeline_mode = #tpu.pipeline_mode<synchronous>, transform_indices = @transform_1, window_bounds = array<i64: 36, 128>}, {pipeline_mode = #tpu.pipeline_mode<synchronous>, transform_indices = @transform_2, window_bounds = array<i64: 1, 128>}, {pipeline_mode = #tpu.pipeline_mode<synchronous>, transform_indices = @transform_3, window_bounds = array<i64: 76, 128>}, {pipeline_mode = #tpu.pipeline_mode<synchronous>, transform_indices = @transform_4, window_bounds = array<i64: 1, 128>}, {transform_indices = @transform_5, window_bounds = array<i64: 1, 256, 128>}]} {
    %c0 = arith.constant 0 : index
    %c0_0 = arith.constant 0 : index
    %c0_1 = arith.constant 0 : index
    %c0_2 = arith.constant 0 : index
    %0 = vector.load %arg1[%c0, %c0_0, %c0_1, %c0_2] : memref<1x18x18x4xbf16, #tpu.memory_space<vmem>>, vector<1x18x18x4xbf16>
    %1 = vector.shape_cast %0 : vector<1x18x18x4xbf16> to vector<18x18x4xbf16>
    %2 = vector.extract_strided_slice %1 {offsets = [0, 0, 0], sizes = [16, 16, 4], strides = [1, 1, 1]} : vector<18x18x4xbf16> to vector<16x16x4xbf16>
    %3 = vector.shape_cast %2 : vector<16x16x4xbf16> to vector<256x4xbf16>
    %4 = vector.extract_strided_slice %1 {offsets = [0, 1, 0], sizes = [16, 16, 4], strides = [1, 1, 1]} : vector<18x18x4xbf16> to vector<16x16x4xbf16>
    %5 = vector.shape_cast %4 : vector<16x16x4xbf16> to vector<256x4xbf16>
    %6 = vector.extract_strided_slice %1 {offsets = [0, 2, 0], sizes = [16, 16, 4], strides = [1, 1, 1]} : vector<18x18x4xbf16> to vector<16x16x4xbf16>
    %7 = vector.shape_cast %6 : vector<16x16x4xbf16> to vector<256x4xbf16>
    %8 = vector.extract_strided_slice %1 {offsets = [1, 0, 0], sizes = [16, 16, 4], strides = [1, 1, 1]} : vector<18x18x4xbf16> to vector<16x16x4xbf16>
    %9 = vector.shape_cast %8 : vector<16x16x4xbf16> to vector<256x4xbf16>
    %10 = vector.extract_strided_slice %1 {offsets = [1, 1, 0], sizes = [16, 16, 4], strides = [1, 1, 1]} : vector<18x18x4xbf16> to vector<16x16x4xbf16>
    %11 = vector.shape_cast %10 : vector<16x16x4xbf16> to vector<256x4xbf16>
    %12 = vector.extract_strided_slice %1 {offsets = [1, 2, 0], sizes = [16, 16, 4], strides = [1, 1, 1]} : vector<18x18x4xbf16> to vector<16x16x4xbf16>
    %13 = vector.shape_cast %12 : vector<16x16x4xbf16> to vector<256x4xbf16>
    %14 = vector.extract_strided_slice %1 {offsets = [2, 0, 0], sizes = [16, 16, 4], strides = [1, 1, 1]} : vector<18x18x4xbf16> to vector<16x16x4xbf16>
    %15 = vector.shape_cast %14 : vector<16x16x4xbf16> to vector<256x4xbf16>
    %16 = vector.extract_strided_slice %1 {offsets = [2, 1, 0], sizes = [16, 16, 4], strides = [1, 1, 1]} : vector<18x18x4xbf16> to vector<16x16x4xbf16>
    %17 = vector.shape_cast %16 : vector<16x16x4xbf16> to vector<256x4xbf16>
    %18 = vector.extract_strided_slice %1 {offsets = [2, 2, 0], sizes = [16, 16, 4], strides = [1, 1, 1]} : vector<18x18x4xbf16> to vector<16x16x4xbf16>
    %19 = vector.shape_cast %18 : vector<16x16x4xbf16> to vector<256x4xbf16>
    %20 = tpu.concatenate %3, %5, %7, %9, %11, %13, %15, %17, %19 in 1 : vector<256x4xbf16>, vector<256x4xbf16>, vector<256x4xbf16>, vector<256x4xbf16>, vector<256x4xbf16>, vector<256x4xbf16>, vector<256x4xbf16>, vector<256x4xbf16>, vector<256x4xbf16> -> vector<256x36xbf16>
    %c0_3 = arith.constant 0 : index
    %c0_4 = arith.constant 0 : index
    %21 = vector.load %arg2[%c0_3, %c0_4] : memref<36x128xbf16, #tpu.memory_space<vmem>>, vector<36x128xbf16>
    %cst = arith.constant dense<0.000000e+00> : vector<256x128xf32>
    %22 = tpu.matmul %20, %21, %cst {dimension_numbers = #tpu.dot_dimension_numbers<[1], [0], [0], [1], [0, 0, 1, 1], [], []>} : vector<256x36xbf16>, vector<36x128xbf16>, vector<256x128xf32> -> vector<256x128xf32>
    %c0_5 = arith.constant 0 : index
    %c0_6 = arith.constant 0 : index
    %23 = vector.load %arg3[%c0_5, %c0_6] : memref<1x128xf32, #tpu.memory_space<vmem>>, vector<1x128xf32>
    %24 = vector.broadcast %23 : vector<1x128xf32> to vector<256x128xf32>
    %25 = arith.addf %22, %24 : vector<256x128xf32>
    %cst_7 = arith.constant 0.000000e+00 : f32
    %26 = vector.broadcast %cst_7 : f32 to vector<256x128xf32>
    %27 = arith.cmpf ogt, %25, %26 : vector<256x128xf32>
    %cst_8 = arith.constant 0.00999999977 : f32
    %28 = vector.broadcast %cst_8 : f32 to vector<256x128xf32>
    %29 = arith.mulf %28, %25 : vector<256x128xf32>
    %30 = arith.select %27, %25, %29 : vector<256x128xi1>, vector<256x128xf32>
    %31 = vector.extract_strided_slice %30 {offsets = [0, 0], sizes = [256, 8], strides = [1, 1]} : vector<256x128xf32> to vector<256x8xf32>
    %32 = arith.truncf %31 : vector<256x8xf32> to vector<256x8xbf16>
    %33 = vector.shape_cast %32 : vector<256x8xbf16> to vector<16x16x8xbf16>
    %cst_9 = arith.constant 0.000000e+00 : bf16
    %34 = vector.broadcast %cst_9 : bf16 to vector<1x16x8xbf16>
    %cst_10 = arith.constant 0.000000e+00 : bf16
    %35 = vector.broadcast %cst_10 : bf16 to vector<18x1x8xbf16>
    %36 = tpu.concatenate %34, %33, %34 in 0 : vector<1x16x8xbf16>, vector<16x16x8xbf16>, vector<1x16x8xbf16> -> vector<18x16x8xbf16>
    %37 = tpu.concatenate %35, %36, %35 in 1 : vector<18x1x8xbf16>, vector<18x16x8xbf16>, vector<18x1x8xbf16> -> vector<18x18x8xbf16>
    %38 = vector.extract_strided_slice %37 {offsets = [0, 0, 0], sizes = [16, 16, 8], strides = [1, 1, 1]} : vector<18x18x8xbf16> to vector<16x16x8xbf16>
    %39 = vector.shape_cast %38 : vector<16x16x8xbf16> to vector<256x8xbf16>
    %40 = vector.extract_strided_slice %37 {offsets = [0, 1, 0], sizes = [16, 16, 8], strides = [1, 1, 1]} : vector<18x18x8xbf16> to vector<16x16x8xbf16>
    %41 = vector.shape_cast %40 : vector<16x16x8xbf16> to vector<256x8xbf16>
    %42 = vector.extract_strided_slice %37 {offsets = [0, 2, 0], sizes = [16, 16, 8], strides = [1, 1, 1]} : vector<18x18x8xbf16> to vector<16x16x8xbf16>
    %43 = vector.shape_cast %42 : vector<16x16x8xbf16> to vector<256x8xbf16>
    %44 = vector.extract_strided_slice %37 {offsets = [1, 0, 0], sizes = [16, 16, 8], strides = [1, 1, 1]} : vector<18x18x8xbf16> to vector<16x16x8xbf16>
    %45 = vector.shape_cast %44 : vector<16x16x8xbf16> to vector<256x8xbf16>
    %46 = vector.extract_strided_slice %37 {offsets = [1, 1, 0], sizes = [16, 16, 8], strides = [1, 1, 1]} : vector<18x18x8xbf16> to vector<16x16x8xbf16>
    %47 = vector.shape_cast %46 : vector<16x16x8xbf16> to vector<256x8xbf16>
    %48 = vector.extract_strided_slice %37 {offsets = [1, 2, 0], sizes = [16, 16, 8], strides = [1, 1, 1]} : vector<18x18x8xbf16> to vector<16x16x8xbf16>
    %49 = vector.shape_cast %48 : vector<16x16x8xbf16> to vector<256x8xbf16>
    %50 = vector.extract_strided_slice %37 {offsets = [2, 0, 0], sizes = [16, 16, 8], strides = [1, 1, 1]} : vector<18x18x8xbf16> to vector<16x16x8xbf16>
    %51 = vector.shape_cast %50 : vector<16x16x8xbf16> to vector<256x8xbf16>
    %52 = vector.extract_strided_slice %37 {offsets = [2, 1, 0], sizes = [16, 16, 8], strides = [1, 1, 1]} : vector<18x18x8xbf16> to vector<16x16x8xbf16>
    %53 = vector.shape_cast %52 : vector<16x16x8xbf16> to vector<256x8xbf16>
    %54 = vector.extract_strided_slice %37 {offsets = [2, 2, 0], sizes = [16, 16, 8], strides = [1, 1, 1]} : vector<18x18x8xbf16> to vector<16x16x8xbf16>
    %55 = vector.shape_cast %54 : vector<16x16x8xbf16> to vector<256x8xbf16>
    %56 = vector.extract_strided_slice %1 {offsets = [1, 1, 0], sizes = [16, 16, 4], strides = [1, 1, 1]} : vector<18x18x4xbf16> to vector<16x16x4xbf16>
    %57 = vector.shape_cast %56 : vector<16x16x4xbf16> to vector<256x4xbf16>
    %58 = tpu.concatenate %39, %41, %43, %45, %47, %49, %51, %53, %55, %57 in 1 : vector<256x8xbf16>, vector<256x8xbf16>, vector<256x8xbf16>, vector<256x8xbf16>, vector<256x8xbf16>, vector<256x8xbf16>, vector<256x8xbf16>, vector<256x8xbf16>, vector<256x8xbf16>, vector<256x4xbf16> -> vector<256x76xbf16>
    %c0_11 = arith.constant 0 : index
    %c0_12 = arith.constant 0 : index
    %59 = vector.load %arg4[%c0_11, %c0_12] : memref<76x128xbf16, #tpu.memory_space<vmem>>, vector<76x128xbf16>
    %cst_13 = arith.constant dense<0.000000e+00> : vector<256x128xf32>
    %60 = tpu.matmul %58, %59, %cst_13 {dimension_numbers = #tpu.dot_dimension_numbers<[1], [0], [0], [1], [0, 0, 1, 1], [], []>} : vector<256x76xbf16>, vector<76x128xbf16>, vector<256x128xf32> -> vector<256x128xf32>
    %c0_14 = arith.constant 0 : index
    %c0_15 = arith.constant 0 : index
    %61 = vector.load %arg5[%c0_14, %c0_15] : memref<1x128xf32, #tpu.memory_space<vmem>>, vector<1x128xf32>
    %62 = vector.broadcast %61 : vector<1x128xf32> to vector<256x128xf32>
    %63 = arith.addf %60, %62 : vector<256x128xf32>
    %cst_16 = arith.constant 0.000000e+00 : f32
    %64 = vector.broadcast %cst_16 : f32 to vector<256x128xf32>
    %65 = arith.maximumf %63, %64 : vector<256x128xf32>
    %66 = vector.shape_cast %65 : vector<256x128xf32> to vector<1x256x128xf32>
    %c0_17 = arith.constant 0 : index
    %c0_18 = arith.constant 0 : index
    %c0_19 = arith.constant 0 : index
    %67 = vector.load %arg6[%c0_17, %c0_18, %c0_19] : memref<1x256x128xf32, #tpu.memory_space<vmem>>, vector<1x256x128xf32>
    tpu.vector_store %arg6[%c0_17, %c0_18, %c0_19], %66 {strides = array<i32>} : memref<1x256x128xf32, #tpu.memory_space<vmem>>, vector<1x256x128xf32>,
    return
  }
  func.func @transform_0(%arg0: i32) -> (i32, i32, i32, i32) {
    %c0_i32 = arith.constant 0 : i32
    %c0_i32_0 = arith.constant 0 : i32
    %c0_i32_1 = arith.constant 0 : i32
    %c0_i32_2 = arith.constant 0 : i32
    return %arg0, %c0_i32, %c0_i32_0, %c0_i32_1 : i32, i32, i32, i32
  }
  func.func @transform_1(%arg0: i32) -> (i32, i32) {
    %c0_i32 = arith.constant 0 : i32
    %c0_i32_0 = arith.constant 0 : i32
    %c0_i32_1 = arith.constant 0 : i32
    return %c0_i32, %c0_i32_0 : i32, i32
  }
  func.func @transform_2(%arg0: i32) -> (i32, i32) {
    %c0_i32 = arith.constant 0 : i32
    %c0_i32_0 = arith.constant 0 : i32
    %c0_i32_1 = arith.constant 0 : i32
    return %c0_i32, %c0_i32_0 : i32, i32
  }
  func.func @transform_3(%arg0: i32) -> (i32, i32) {
    %c0_i32 = arith.constant 0 : i32
    %c0_i32_0 = arith.constant 0 : i32
    %c0_i32_1 = arith.constant 0 : i32
    return %c0_i32, %c0_i32_0 : i32, i32
  }
  func.func @transform_4(%arg0: i32) -> (i32, i32) {
    %c0_i32 = arith.constant 0 : i32
    %c0_i32_0 = arith.constant 0 : i32
    %c0_i32_1 = arith.constant 0 : i32
    return %c0_i32, %c0_i32_0 : i32, i32
  }
  func.func @transform_5(%arg0: i32) -> (i32, i32, i32) {
    %c0_i32 = arith.constant 0 : i32
    %c0_i32_0 = arith.constant 0 : i32
    %c0_i32_1 = arith.constant 0 : i32
    return %arg0, %c0_i32, %c0_i32_0 : i32, i32, i32
  }
}

</mosaic_0001>

<llo_original>
// kernel: tpu_custom_call.1
$region0: #{tpu_custom_call.1}
  #allocation0 [shape = 'u32[]', space=smem, size = 0x4, offset = 0x4, fixed_abs, tag = 'smem constant byte address 0x4 - core index']
  #allocation1 [shape = 'u32[144,128]{1,0:T(1,128)}', space=vmem, size = 0x12000, scoped, tag = 'internal scratch']
  %s0 = inlined_call_operand.vmem [shape: bf16[2,18,18,4], index: 0, kind: input, shape index: {}]
  %s1 = inlined_call_operand.vmem [shape: bf16[36,128], index: 1, kind: input, shape index: {}]
  %s2 = inlined_call_operand.vmem [shape: f32[1,128], index: 2, kind: input, shape index: {}]
  %s3 = inlined_call_operand.vmem [shape: bf16[76,128], index: 3, kind: input, shape index: {}]
  %s4 = inlined_call_operand.vmem [shape: f32[1,128], index: 4, kind: input, shape index: {}]
  %s5 = inlined_call_operand.hbm [shape: f32[2,256,128], index: 5, kind: output, shape index: {}]
  %s6 = sld [smem:[#allocation0]]
  $region53: #{tpu_custom_call.1} parent=0
    _
  %s8 = ssub.s32 1, %s6
  %s9 = scalar_select 0, %s8, %s6
  $region1: #{tpu_custom_call.1} parent=0
    #allocation2 [shape = 'u8[262144]{0}', space=vmem, size = 0x40000, scoped, tag = 'output window, operand 0']
    #allocation3 [shape = 's32[2]{0}', space=sflag, size = 0x8, scoped, tag = 'scoped memory for tpu_custom_call.1']
    %10 = vsyncpa [#allocation3], 0
    %s11 = scalar_lea.sflag [#allocation3], 1
    %12 = vsyncpa %s11, 0
    loop: start=0, step=1, limit=4
    $region2: #{tpu_custom_call.1} parent=1 // loop_pre_header
      _
    $region3: #{tpu_custom_call.1} parent=1 // loop_header
      %s14 = sphi 0, %s18
      %p15 = scmp.ge.s32.totalorder %s14, 4
      %s24 = sphi 0, %s26
      %s27 = sphi 0, %s24
      %s28 = sphi 0, %s27
      %s44 = sphi 0, %s28
      %s48 = sphi 0, %s48
      %s50 = sphi 0, %s48
      %s51 = sphi 0, %s50
      %s65 = sphi 0, %s51
      %s69 = sphi 0, %s69
      %s71 = sphi 0, %s69
      %s72 = sphi 0, %s71
      %s86 = sphi 0, %s72
      %s90 = sphi 0, %s90
      %s92 = sphi 0, %s90
      %s93 = sphi 0, %s92
      %s107 = sphi 0, %s93
      %s111 = sphi 0, %s111
      %s113 = sphi 0, %s111
      %s114 = sphi 0, %s113
      %s128 = sphi 0, %s114
      %s134 = sphi 0, %s136
      %s137 = sphi 0, %s134
      %s138 = sphi 0, %s137
      %s154 = sphi 0, %s138
    $region4: #{tpu_custom_call.1} parent=1 // loop_header_branch
      %17 = sbr.rel (%p15) target = $region8
    $region5: #{tpu_custom_call.1} parent=1 // loop_body
      %s19 = ssub.s32 %s14, 1
      %s20 = ssub.s32 %s14, 2
      %s21 = sadd.s32 %s14, 1
      %s22 = ssub.s32 %s14, %s21
      %p23 = scmp.eq.s32.totalorder %s22, 0
      %s25 = sadd.s32 %s24, 1
      %s26 = scalar_select %p23, %s24, %s25
      %p29 = pneg %p23
      %p30 = scmp.eq.s32.totalorder %s14, 1
      %p31 = por %p29, %p30
      %p32 = scmp.ne.s32.totalorder %s24, %s27
      %p33 = scmp.eq.s32.totalorder %s14, 0
      %p34 = por %p32, %p33
      %p35 = scmp.ne.s32.totalorder %s24, %s27
      %p36 = scmp.eq.s32.totalorder %s19, 1
      %p37 = por %p35, %p36
      %p38 = scmp.ne.s32.totalorder %s27, %s28
      %p39 = scmp.eq.s32.totalorder %s19, 0
      %p40 = por %p38, %p39
      %p41 = scmp.ne.s32.totalorder %s27, %s28
      %p42 = scmp.eq.s32.totalorder %s20, 1
      %p43 = por %p41, %p42
      %p45 = scmp.ne.s32.totalorder %s28, %s44
      %p46 = scmp.eq.s32.totalorder %s20, 0
      %p47 = por %p45, %p46
      %s49 = sadd.s32 %s48, 1
      %p52 = scmp.eq.s32.totalorder %s14, 1
      %p53 = scmp.ne.s32.totalorder %s48, %s50
      %p54 = scmp.eq.s32.totalorder %s14, 0
      %p55 = por %p53, %p54
      %p56 = scmp.ne.s32.totalorder %s48, %s50
      %p57 = scmp.eq.s32.totalorder %s19, 1
      %p58 = por %p56, %p57
      %p59 = scmp.ne.s32.totalorder %s50, %s51
      %p60 = scmp.eq.s32.totalorder %s19, 0
      %p61 = por %p59, %p60
      %p62 = scmp.ne.s32.totalorder %s50, %s51
      %p63 = scmp.eq.s32.totalorder %s20, 1
      %p64 = por %p62, %p63
      %p66 = scmp.ne.s32.totalorder %s51, %s65
      %p67 = scmp.eq.s32.totalorder %s20, 0
      %p68 = por %p66, %p67
      %s70 = sadd.s32 %s69, 1
      %p73 = scmp.eq.s32.totalorder %s14, 1
      %p74 = scmp.ne.s32.totalorder %s69, %s71
      %p75 = scmp.eq.s32.totalorder %s14, 0
      %p76 = por %p74, %p75
      %p77 = scmp.ne.s32.totalorder %s69, %s71
      %p78 = scmp.eq.s32.totalorder %s19, 1
      %p79 = por %p77, %p78
      %p80 = scmp.ne.s32.totalorder %s71, %s72
      %p81 = scmp.eq.s32.totalorder %s19, 0
      %p82 = por %p80, %p81
      %p83 = scmp.ne.s32.totalorder %s71, %s72
      %p84 = scmp.eq.s32.totalorder %s20, 1
      %p85 = por %p83, %p84
      %p87 = scmp.ne.s32.totalorder %s72, %s86
      %p88 = scmp.eq.s32.totalorder %s20, 0
      %p89 = por %p87, %p88
      %s91 = sadd.s32 %s90, 1
      %p94 = scmp.eq.s32.totalorder %s14, 1
      %p95 = scmp.ne.s32.totalorder %s90, %s92
      %p96 = scmp.eq.s32.totalorder %s14, 0
      %p97 = por %p95, %p96
      %p98 = scmp.ne.s32.totalorder %s90, %s92
      %p99 = scmp.eq.s32.totalorder %s19, 1
      %p100 = por %p98, %p99
      %p101 = scmp.ne.s32.totalorder %s92, %s93
      %p102 = scmp.eq.s32.totalorder %s19, 0
      %p103 = por %p101, %p102
      %p104 = scmp.ne.s32.totalorder %s92, %s93
      %p105 = scmp.eq.s32.totalorder %s20, 1
      %p106 = por %p104, %p105
      %p108 = scmp.ne.s32.totalorder %s93, %s107
      %p109 = scmp.eq.s32.totalorder %s20, 0
      %p110 = por %p108, %p109
      %s112 = sadd.s32 %s111, 1
      %p115 = scmp.eq.s32.totalorder %s14, 1
      %p116 = scmp.ne.s32.totalorder %s111, %s113
      %p117 = scmp.eq.s32.totalorder %s14, 0
      %p118 = por %p116, %p117
      %p119 = scmp.ne.s32.totalorder %s111, %s113
      %p120 = scmp.eq.s32.totalorder %s19, 1
      %p121 = por %p119, %p120
      %p122 = scmp.ne.s32.totalorder %s113, %s114
      %p123 = scmp.eq.s32.totalorder %s19, 0
      %p124 = por %p122, %p123
      %p125 = scmp.ne.s32.totalorder %s113, %s114
      %p126 = scmp.eq.s32.totalorder %s20, 1
      %p127 = por %p125, %p126
      %p129 = scmp.ne.s32.totalorder %s114, %s128
      %p130 = scmp.eq.s32.totalorder %s20, 0
      %p131 = por %p129, %p130
      %s132 = ssub.s32 %s14, %s21
      %p133 = scmp.eq.s32.totalorder %s132, 0
      %s135 = sadd.s32 %s134, 1
      %s136 = scalar_select %p133, %s134, %s135
      %p139 = pneg %p133
      %p140 = scmp.eq.s32.totalorder %s14, 1
      %p141 = por %p139, %p140
      %p142 = scmp.ne.s32.totalorder %s134, %s137
      %p143 = scmp.eq.s32.totalorder %s14, 0
      %p144 = por %p142, %p143
      %p145 = scmp.ne.s32.totalorder %s134, %s137
      %p146 = scmp.eq.s32.totalorder %s19, 1
      %p147 = por %p145, %p146
      %p148 = scmp.ne.s32.totalorder %s137, %s138
      %p149 = scmp.eq.s32.totalorder %s19, 0
      %p150 = por %p148, %p149
      %p151 = scmp.ne.s32.totalorder %s137, %s138
      %p152 = scmp.eq.s32.totalorder %s20, 1
      %p153 = por %p151, %p152
      %p155 = scmp.ne.s32.totalorder %s138, %s154
      %p156 = scmp.eq.s32.totalorder %s20, 0
      %p157 = por %p155, %p156
      %p158 = scmp.le.s32.totalorder 1, %s14
      %p159 = scmp.lt.s32.totalorder %s14, 3
      %p160 = pnand %p158, %p159
      %p161 = pneg %p160
      // Predicated region
      $region9: #{tpu_custom_call.1} parent=5 // pred_check
        _
      $region10: #{tpu_custom_call.1} parent=5 // pred_check_branch
        %163 = sbr.rel (%p160) target = $region12
      $region11: #{tpu_custom_call.1} parent=5 // pred_region
        %s164 = ssub.s32 %s14, 1
        // Predicated region
        $region13: #{tpu_custom_call.1} parent=11 // pred_check
          %p165 = pneg %p61
        $region14: #{tpu_custom_call.1} parent=11 // pred_check_branch
          %167 = sbr.rel (%p165) target = $region16
        $region15: #{tpu_custom_call.1} parent=11 // pred_region
          _
        $region16: #{tpu_custom_call.1} parent=11 // pred_fallthru
          _
        // Predicated region
        $region17: #{tpu_custom_call.1} parent=11 // pred_check
          %p168 = pneg %p82
        $region18: #{tpu_custom_call.1} parent=11 // pred_check_branch
          %170 = sbr.rel (%p168) target = $region20
        $region19: #{tpu_custom_call.1} parent=11 // pred_region
          _
        $region20: #{tpu_custom_call.1} parent=11 // pred_fallthru
          _
        // Predicated region
        $region21: #{tpu_custom_call.1} parent=11 // pred_check
          %p171 = pneg %p103
        $region22: #{tpu_custom_call.1} parent=11 // pred_check_branch
          %173 = sbr.rel (%p171) target = $region24
        $region23: #{tpu_custom_call.1} parent=11 // pred_region
          _
        $region24: #{tpu_custom_call.1} parent=11 // pred_fallthru
          _
        // Predicated region
        $region25: #{tpu_custom_call.1} parent=11 // pred_check
          %p174 = pneg %p124
        $region26: #{tpu_custom_call.1} parent=11 // pred_check_branch
          %176 = sbr.rel (%p174) target = $region28
        $region27: #{tpu_custom_call.1} parent=11 // pred_region
          _
        $region28: #{tpu_custom_call.1} parent=11 // pred_fallthru
          _
      $region12: #{tpu_custom_call.1} parent=5 // pred_fallthru
        _
      %p177 = scmp.lt.s32.totalorder %s14, 2
      // Predicated region
      $region29: #{tpu_custom_call.1} parent=5 // pred_check
        %p178 = pneg %p177
      $region30: #{tpu_custom_call.1} parent=5 // pred_check_branch
        %180 = sbr.rel (%p178) target = $region32
      $region31: #{tpu_custom_call.1} parent=5 // pred_region
        // Predicated region
        $region33: #{tpu_custom_call.1} parent=31 // pred_check
          %p181 = pneg %p34
        $region34: #{tpu_custom_call.1} parent=31 // pred_check_branch
          %183 = sbr.rel (%p181) target = $region36
        $region35: #{tpu_custom_call.1} parent=31 // pred_region
          %p184 = scmp.lt.s32.totalorder %s14, 1
          %s185 = scalar_select %p184, %s14, 1
          %s186 = smul.addr %s185, 54
          %s187 = smul.addr %s186, 4
          %s188 = scalar_lea.vmem %s0, %s187
        $region36: #{tpu_custom_call.1} parent=31 // pred_fallthru
          _
      $region32: #{tpu_custom_call.1} parent=5 // pred_fallthru
        _
      %p189 = scmp.le.s32.totalorder 1, %s14
      %p190 = scmp.lt.s32.totalorder %s14, 3
      %p191 = pnand %p189, %p190
      %p192 = pneg %p191
      // Predicated region
      $region37: #{tpu_custom_call.1} parent=5 // pred_check
        _
      $region38: #{tpu_custom_call.1} parent=5 // pred_check_branch
        %194 = sbr.rel (%p191) target = $region40
      $region39: #{tpu_custom_call.1} parent=5 // pred_region
        %s195 = ssub.s32 %s14, 1
        %p196 = scmp.lt.s32.totalorder %s19, 1
        %s197 = scalar_select %p196, %s19, 1
        %s198 = smul.addr %s197, 54
        %s199 = smul.addr %s198, 4
        %s200 = scalar_lea.vmem %s0, %s199
        %p201 = pneg %p40
        %p202 = pneg %p37
        %p203 = pneg %p61
        %p204 = pneg %p58
        %p205 = pneg %p82
        %p206 = pneg %p79
        %p207 = pneg %p103
        %p208 = pneg %p100
        %p209 = pneg %p124
        %p210 = pneg %p121
        %p211 = pneg %p150
        %p212 = pneg %p147
        %s213 = sand.u32 %s137, 1
        %s214 = scalar_lea.sflag [#allocation3], %s213
        %s215 = sand.u32 %s137, 1
        %s216 = smul.addr %s215, 256
        %s217 = scalar_lea.vmem [#allocation2], %s216
        %p218 = scmp.lt.s32.totalorder %s19, 1
        %s219 = scalar_select %p218, %s19, 1
        %s220 = smul.addr %s219, 54
        %s221 = smul.addr %s220, 4
        %s222 = scalar_lea.vmem %s0, %s221
        %v224 = vld [vmem:[%s222] sm:$0xf]
        %v225 = vld [vmem:[%s222 + $0x4] sm:$0xf]
        %v226 = vld [vmem:[%s222 + $0x8] sm:$0x1]
        %v227 = vld [vmem:[%s222 + $0xc] sm:$0xf]
        %v228 = vld [vmem:[%s222 + $0x10] sm:$0xf]
        %v229 = vld [vmem:[%s222 + $0x14] sm:$0x1]
        %v230 = vld [vmem:[%s222 + $0x18] sm:$0xf]
        %v231 = vld [vmem:[%s222 + $0x1c] sm:$0xf]
        %v232 = vld [vmem:[%s222 + $0x20] sm:$0x1]
        %v233 = vld [vmem:[%s222 + $0x24] sm:$0xf]
        %v234 = vld [vmem:[%s222 + $0x28] sm:$0xf]
        %v235 = vld [vmem:[%s222 + $0x2c] sm:$0x1]
        %v236 = vld [vmem:[%s222 + $0x30] sm:$0xf]
        %v237 = vld [vmem:[%s222 + $0x34] sm:$0xf]
        %v238 = vld [vmem:[%s222 + $0x38] sm:$0x1]
        %v239 = vld [vmem:[%s222 + $0x3c] sm:$0xf]
        %v240 = vld [vmem:[%s222 + $0x40] sm:$0xf]
        %v241 = vld [vmem:[%s222 + $0x44] sm:$0x1]
        %v242 = vld [vmem:[%s222 + $0x48] sm:$0xf]
        %v243 = vld [vmem:[%s222 + $0x4c] sm:$0xf]
        %v244 = vld [vmem:[%s222 + $0x50] sm:$0x1]
        %v245 = vld [vmem:[%s222 + $0x54] sm:$0xf]
        %v246 = vld [vmem:[%s222 + $0x58] sm:$0xf]
        %v247 = vld [vmem:[%s222 + $0x5c] sm:$0x1]
        %v248 = vld [vmem:[%s222 + $0x60] sm:$0xf]
        %v249 = vld [vmem:[%s222 + $0x64] sm:$0xf]
        %v250 = vld [vmem:[%s222 + $0x68] sm:$0x1]
        %v251 = vld [vmem:[%s222 + $0x6c] sm:$0xf]
        %v252 = vld [vmem:[%s222 + $0x70] sm:$0xf]
        %v253 = vld [vmem:[%s222 + $0x74] sm:$0x1]
        %v254 = vld [vmem:[%s222 + $0x78] sm:$0xf]
        %v255 = vld [vmem:[%s222 + $0x7c] sm:$0xf]
        %v256 = vld [vmem:[%s222 + $0x80] sm:$0x1]
        %v257 = vld [vmem:[%s222 + $0x84] sm:$0xf]
        %v258 = vld [vmem:[%s222 + $0x88] sm:$0xf]
        %v259 = vld [vmem:[%s222 + $0x8c] sm:$0x1]
        %v260 = vld [vmem:[%s222 + $0x90] sm:$0xf]
        %v261 = vld [vmem:[%s222 + $0x94] sm:$0xf]
        %v262 = vld [vmem:[%s222 + $0x98] sm:$0x1]
        %v263 = vld [vmem:[%s222 + $0x9c] sm:$0xf]
        %v264 = vld [vmem:[%s222 + $0xa0] sm:$0xf]
        %v265 = vld [vmem:[%s222 + $0xa4] sm:$0x1]
        %v266 = vld [vmem:[%s222 + $0xa8] sm:$0xf]
        %v267 = vld [vmem:[%s222 + $0xac] sm:$0xf]
        %v268 = vld [vmem:[%s222 + $0xb0] sm:$0x1]
        %v269 = vld [vmem:[%s222 + $0xb4] sm:$0xf]
        %v270 = vld [vmem:[%s222 + $0xb8] sm:$0xf]
        %v271 = vld [vmem:[%s222 + $0xbc] sm:$0x1]
        %v272 = vld [vmem:[%s222 + $0xc0] sm:$0xf]
        %v273 = vld [vmem:[%s222 + $0xc4] sm:$0xf]
        %v274 = vld [vmem:[%s222 + $0xc8] sm:$0x1]
        %v275 = vld [vmem:[%s222 + $0xcc] sm:$0xf]
        %v276 = vld [vmem:[%s222 + $0xd0] sm:$0xf]
        %v277 = vld [vmem:[%s222 + $0xd4] sm:$0x1]
        %vm278 = vsmask.f32 3328
        %vm279 = vsmask.f32 7440
        %vm280 = vmor %vm278, %vm279
        %v282 = vshrl.u32 %v224, 16
        %v284 = vrot.slane %v282, 4
        %v285 = vshll.u32 %v224, 16
        %v287 = vrot.slane %v285, 5
        %v288 = vor.u32 %v284, %v287
        %v289 = vrot.slane %v288, 4
        %v291 = vshll.u32 %v225, 16
        %v293 = vrot.slane %v291, 5
        %v294 = vsel %vm280, %v289, %v293
        %v295 = vshrl.u32 %v225, 16
        %v297 = vrot.slane %v295, 4
        %v298 = vor.u32 %v297, %v293
        %v299 = vrot.slane %v298, 4
        %v301 = vshll.u32 %v226, 16
        %v303 = vrot.slane %v301, 5
        %v304 = vsel %vm280, %v299, %v303
        %v306 = vshrl.u32 %v227, 16
        %v308 = vrot.slane %v306, 4
        %v309 = vshll.u32 %v227, 16
        %v311 = vrot.slane %v309, 5
        %v312 = vor.u32 %v308, %v311
        %v313 = vrot.slane %v312, 4
        %v315 = vshll.u32 %v228, 16
        %v317 = vrot.slane %v315, 5
        %v318 = vsel %vm280, %v313, %v317
        %v319 = vshrl.u32 %v228, 16
        %v321 = vrot.slane %v319, 4
        %v322 = vor.u32 %v321, %v317
        %v323 = vrot.slane %v322, 4
        %v325 = vshll.u32 %v229, 16
        %v327 = vrot.slane %v325, 5
        %v328 = vsel %vm280, %v323, %v327
        %v330 = vshrl.u32 %v230, 16
        %v332 = vrot.slane %v330, 4
        %v333 = vshll.u32 %v230, 16
        %v335 = vrot.slane %v333, 5
        %v336 = vor.u32 %v332, %v335
        %v337 = vrot.slane %v336, 4
        %v339 = vshll.u32 %v231, 16
        %v341 = vrot.slane %v339, 5
        %v342 = vsel %vm280, %v337, %v341
        %v343 = vshrl.u32 %v231, 16
        %v345 = vrot.slane %v343, 4
        %v346 = vor.u32 %v345, %v341
        %v347 = vrot.slane %v346, 4
        %v349 = vshll.u32 %v232, 16
        %v351 = vrot.slane %v349, 5
        %v352 = vsel %vm280, %v347, %v351
        %v354 = vshrl.u32 %v233, 16
        %v356 = vrot.slane %v354, 4
        %v357 = vshll.u32 %v233, 16
        %v359 = vrot.slane %v357, 5
        %v360 = vor.u32 %v356, %v359
        %v361 = vrot.slane %v360, 4
        %v363 = vshll.u32 %v234, 16
        %v365 = vrot.slane %v363, 5
        %v366 = vsel %vm280, %v361, %v365
        %v367 = vshrl.u32 %v234, 16
        %v369 = vrot.slane %v367, 4
        %v370 = vor.u32 %v369, %v365
        %v371 = vrot.slane %v370, 4
        %v373 = vshll.u32 %v235, 16
        %v375 = vrot.slane %v373, 5
        %v376 = vsel %vm280, %v371, %v375
        %v378 = vshrl.u32 %v236, 16
        %v380 = vrot.slane %v378, 4
        %v381 = vshll.u32 %v236, 16
        %v383 = vrot.slane %v381, 5
        %v384 = vor.u32 %v380, %v383
        %v385 = vrot.slane %v384, 4
        %v387 = vshll.u32 %v237, 16
        %v389 = vrot.slane %v387, 5
        %v390 = vsel %vm280, %v385, %v389
        %v391 = vshrl.u32 %v237, 16
        %v393 = vrot.slane %v391, 4
        %v394 = vor.u32 %v393, %v389
        %v395 = vrot.slane %v394, 4
        %v397 = vshll.u32 %v238, 16
        %v399 = vrot.slane %v397, 5
        %v400 = vsel %vm280, %v395, %v399
        %v402 = vshrl.u32 %v239, 16
        %v404 = vrot.slane %v402, 4
        %v405 = vshll.u32 %v239, 16
        %v407 = vrot.slane %v405, 5
        %v408 = vor.u32 %v404, %v407
        %v409 = vrot.slane %v408, 4
        %v411 = vshll.u32 %v240, 16
        %v413 = vrot.slane %v411, 5
        %v414 = vsel %vm280, %v409, %v413
        %v415 = vshrl.u32 %v240, 16
        %v417 = vrot.slane %v415, 4
        %v418 = vor.u32 %v417, %v413
        %v419 = vrot.slane %v418, 4
        %v421 = vshll.u32 %v241, 16
        %v423 = vrot.slane %v421, 5
        %v424 = vsel %vm280, %v419, %v423
        %v426 = vshrl.u32 %v242, 16
        %v428 = vrot.slane %v426, 4
        %v429 = vshll.u32 %v242, 16
        %v431 = vrot.slane %v429, 5
        %v432 = vor.u32 %v428, %v431
        %v433 = vrot.slane %v432, 4
        %v435 = vshll.u32 %v243, 16
        %v437 = vrot.slane %v435, 5
        %v438 = vsel %vm280, %v433, %v437
        %v439 = vshrl.u32 %v243, 16
        %v441 = vrot.slane %v439, 4
        %v442 = vor.u32 %v441, %v437
        %v443 = vrot.slane %v442, 4
        %v445 = vshll.u32 %v244, 16
        %v447 = vrot.slane %v445, 5
        %v448 = vsel %vm280, %v443, %v447
        %v450 = vshrl.u32 %v245, 16
        %v452 = vrot.slane %v450, 4
        %v453 = vshll.u32 %v245, 16
        %v455 = vrot.slane %v453, 5
        %v456 = vor.u32 %v452, %v455
        %v457 = vrot.slane %v456, 4
        %v459 = vshll.u32 %v246, 16
        %v461 = vrot.slane %v459, 5
        %v462 = vsel %vm280, %v457, %v461
        %v463 = vshrl.u32 %v246, 16
        %v465 = vrot.slane %v463, 4
        %v466 = vor.u32 %v465, %v461
        %v467 = vrot.slane %v466, 4
        %v469 = vshll.u32 %v247, 16
        %v471 = vrot.slane %v469, 5
        %v472 = vsel %vm280, %v467, %v471
        %v474 = vshrl.u32 %v248, 16
        %v476 = vrot.slane %v474, 4
        %v477 = vshll.u32 %v248, 16
        %v479 = vrot.slane %v477, 5
        %v480 = vor.u32 %v476, %v479
        %v481 = vrot.slane %v480, 4
        %v483 = vshll.u32 %v249, 16
        %v485 = vrot.slane %v483, 5
        %v486 = vsel %vm280, %v481, %v485
        %v487 = vshrl.u32 %v249, 16
        %v489 = vrot.slane %v487, 4
        %v490 = vor.u32 %v489, %v485
        %v491 = vrot.slane %v490, 4
        %v493 = vshll.u32 %v250, 16
        %v495 = vrot.slane %v493, 5
        %v496 = vsel %vm280, %v491, %v495
        %v498 = vshrl.u32 %v251, 16
        %v500 = vrot.slane %v498, 4
        %v501 = vshll.u32 %v251, 16
        %v503 = vrot.slane %v501, 5
        %v504 = vor.u32 %v500, %v503
        %v505 = vrot.slane %v504, 4
        %v507 = vshll.u32 %v252, 16
        %v509 = vrot.slane %v507, 5
        %v510 = vsel %vm280, %v505, %v509
        %v511 = vshrl.u32 %v252, 16
        %v513 = vrot.slane %v511, 4
        %v514 = vor.u32 %v513, %v509
        %v515 = vrot.slane %v514, 4
        %v517 = vshll.u32 %v253, 16
        %v519 = vrot.slane %v517, 5
        %v520 = vsel %vm280, %v515, %v519
        %v522 = vshrl.u32 %v254, 16
        %v524 = vrot.slane %v522, 4
        %v525 = vshll.u32 %v254, 16
        %v527 = vrot.slane %v525, 5
        %v528 = vor.u32 %v524, %v527
        %v529 = vrot.slane %v528, 4
        %v531 = vshll.u32 %v255, 16
        %v533 = vrot.slane %v531, 5
        %v534 = vsel %vm280, %v529, %v533
        %v535 = vshrl.u32 %v255, 16
        %v537 = vrot.slane %v535, 4
        %v538 = vor.u32 %v537, %v533
        %v539 = vrot.slane %v538, 4
        %v541 = vshll.u32 %v256, 16
        %v543 = vrot.slane %v541, 5
        %v544 = vsel %vm280, %v539, %v543
        %v546 = vshrl.u32 %v257, 16
        %v548 = vrot.slane %v546, 4
        %v549 = vshll.u32 %v257, 16
        %v551 = vrot.slane %v549, 5
        %v552 = vor.u32 %v548, %v551
        %v553 = vrot.slane %v552, 4
        %v555 = vshll.u32 %v258, 16
        %v557 = vrot.slane %v555, 5
        %v558 = vsel %vm280, %v553, %v557
        %v559 = vshrl.u32 %v258, 16
        %v561 = vrot.slane %v559, 4
        %v562 = vor.u32 %v561, %v557
        %v563 = vrot.slane %v562, 4
        %v565 = vshll.u32 %v259, 16
        %v567 = vrot.slane %v565, 5
        %v568 = vsel %vm280, %v563, %v567
        %v570 = vshrl.u32 %v260, 16
        %v572 = vrot.slane %v570, 4
        %v573 = vshll.u32 %v260, 16
        %v575 = vrot.slane %v573, 5
        %v576 = vor.u32 %v572, %v575
        %v577 = vrot.slane %v576, 4
        %v579 = vshll.u32 %v261, 16
        %v581 = vrot.slane %v579, 5
        %v582 = vsel %vm280, %v577, %v581
        %v583 = vshrl.u32 %v261, 16
        %v585 = vrot.slane %v583, 4
        %v586 = vor.u32 %v585, %v581
        %v587 = vrot.slane %v586, 4
        %v589 = vshll.u32 %v262, 16
        %v591 = vrot.slane %v589, 5
        %v592 = vsel %vm280, %v587, %v591
        %v594 = vshrl.u32 %v263, 16
        %v596 = vrot.slane %v594, 4
        %v597 = vshll.u32 %v263, 16
        %v599 = vrot.slane %v597, 5
        %v600 = vor.u32 %v596, %v599
        %v601 = vrot.slane %v600, 4
        %v603 = vshll.u32 %v264, 16
        %v605 = vrot.slane %v603, 5
        %v606 = vsel %vm280, %v601, %v605
        %v607 = vshrl.u32 %v264, 16
        %v609 = vrot.slane %v607, 4
        %v610 = vor.u32 %v609, %v605
        %v611 = vrot.slane %v610, 4
        %v613 = vshll.u32 %v265, 16
        %v615 = vrot.slane %v613, 5
        %v616 = vsel %vm280, %v611, %v615
        %v618 = vshrl.u32 %v266, 16
        %v620 = vrot.slane %v618, 4
        %v621 = vshll.u32 %v266, 16
        %v623 = vrot.slane %v621, 5
        %v624 = vor.u32 %v620, %v623
        %v625 = vrot.slane %v624, 4
        %v627 = vshll.u32 %v267, 16
        %v629 = vrot.slane %v627, 5
        %v630 = vsel %vm280, %v625, %v629
        %v631 = vshrl.u32 %v267, 16
        %v633 = vrot.slane %v631, 4
        %v634 = vor.u32 %v633, %v629
        %v635 = vrot.slane %v634, 4
        %v637 = vshll.u32 %v268, 16
        %v639 = vrot.slane %v637, 5
        %v640 = vsel %vm280, %v635, %v639
        %v642 = vshrl.u32 %v269, 16
        %v644 = vrot.slane %v642, 4
        %v645 = vshll.u32 %v269, 16
        %v647 = vrot.slane %v645, 5
        %v648 = vor.u32 %v644, %v647
        %v649 = vrot.slane %v648, 4
        %v651 = vshll.u32 %v270, 16
        %v653 = vrot.slane %v651, 5
        %v654 = vsel %vm280, %v649, %v653
        %v655 = vshrl.u32 %v270, 16
        %v657 = vrot.slane %v655, 4
        %v658 = vor.u32 %v657, %v653
        %v659 = vrot.slane %v658, 4
        %v661 = vshll.u32 %v271, 16
        %v663 = vrot.slane %v661, 5
        %v664 = vsel %vm280, %v659, %v663
        %vm713 = vcmask 1042432
        %vm714 = vcmask 1046532
        %vm715 = vmor %vm713, %vm714
        %v716 = vrot.slane %v224, 5
        %v717 = vrot.slane %v716, 4
        %v718 = vrot.slane %v225, 5
        %v719 = vsel %vm715, %v717, %v718
        %v720 = vrot.slane %v718, 4
        %v721 = vrot.slane %v226, 5
        %v722 = vsel %vm715, %v720, %v721
        %v723 = vrot.slane %v227, 5
        %v724 = vrot.slane %v723, 4
        %v725 = vrot.slane %v228, 5
        %v726 = vsel %vm715, %v724, %v725
        %v727 = vrot.slane %v725, 4
        %v728 = vrot.slane %v229, 5
        %v729 = vsel %vm715, %v727, %v728
        %v730 = vrot.slane %v230, 5
        %v731 = vrot.slane %v730, 4
        %v732 = vrot.slane %v231, 5
        %v733 = vsel %vm715, %v731, %v732
        %v734 = vrot.slane %v732, 4
        %v735 = vrot.slane %v232, 5
        %v736 = vsel %vm715, %v734, %v735
        %v737 = vrot.slane %v233, 5
        %v738 = vrot.slane %v737, 4
        %v739 = vrot.slane %v234, 5
        %v740 = vsel %vm715, %v738, %v739
        %v741 = vrot.slane %v739, 4
        %v742 = vrot.slane %v235, 5
        %v743 = vsel %vm715, %v741, %v742
        %v744 = vrot.slane %v236, 5
        %v745 = vrot.slane %v744, 4
        %v746 = vrot.slane %v237, 5
        %v747 = vsel %vm715, %v745, %v746
        %v748 = vrot.slane %v746, 4
        %v749 = vrot.slane %v238, 5
        %v750 = vsel %vm715, %v748, %v749
        %v751 = vrot.slane %v239, 5
        %v752 = vrot.slane %v751, 4
        %v753 = vrot.slane %v240, 5
        %v754 = vsel %vm715, %v752, %v753
        %v755 = vrot.slane %v753, 4
        %v756 = vrot.slane %v241, 5
        %v757 = vsel %vm715, %v755, %v756
        %v758 = vrot.slane %v242, 5
        %v759 = vrot.slane %v758, 4
        %v760 = vrot.slane %v243, 5
        %v761 = vsel %vm715, %v759, %v760
        %v762 = vrot.slane %v760, 4
        %v763 = vrot.slane %v244, 5
        %v764 = vsel %vm715, %v762, %v763
        %v765 = vrot.slane %v245, 5
        %v766 = vrot.slane %v765, 4
        %v767 = vrot.slane %v246, 5
        %v768 = vsel %vm715, %v766, %v767
        %v769 = vrot.slane %v767, 4
        %v770 = vrot.slane %v247, 5
        %v771 = vsel %vm715, %v769, %v770
        %v772 = vrot.slane %v248, 5
        %v773 = vrot.slane %v772, 4
        %v774 = vrot.slane %v249, 5
        %v775 = vsel %vm715, %v773, %v774
        %v776 = vrot.slane %v774, 4
        %v777 = vrot.slane %v250, 5
        %v778 = vsel %vm715, %v776, %v777
        %v779 = vrot.slane %v251, 5
        %v780 = vrot.slane %v779, 4
        %v781 = vrot.slane %v252, 5
        %v782 = vsel %vm715, %v780, %v781
        %v783 = vrot.slane %v781, 4
        %v784 = vrot.slane %v253, 5
        %v785 = vsel %vm715, %v783, %v784
        %v786 = vrot.slane %v254, 5
        %v787 = vrot.slane %v786, 4
        %v788 = vrot.slane %v255, 5
        %v789 = vsel %vm715, %v787, %v788
        %v790 = vrot.slane %v788, 4
        %v791 = vrot.slane %v256, 5
        %v792 = vsel %vm715, %v790, %v791
        %v793 = vrot.slane %v257, 5
        %v794 = vrot.slane %v793, 4
        %v795 = vrot.slane %v258, 5
        %v796 = vsel %vm715, %v794, %v795
        %v797 = vrot.slane %v795, 4
        %v798 = vrot.slane %v259, 5
        %v799 = vsel %vm715, %v797, %v798
        %v800 = vrot.slane %v260, 5
        %v801 = vrot.slane %v800, 4
        %v802 = vrot.slane %v261, 5
        %v803 = vsel %vm715, %v801, %v802
        %v804 = vrot.slane %v802, 4
        %v805 = vrot.slane %v262, 5
        %v806 = vsel %vm715, %v804, %v805
        %v807 = vrot.slane %v263, 5
        %v808 = vrot.slane %v807, 4
        %v809 = vrot.slane %v264, 5
        %v810 = vsel %vm715, %v808, %v809
        %v811 = vrot.slane %v809, 4
        %v812 = vrot.slane %v265, 5
        %v813 = vsel %vm715, %v811, %v812
        %v814 = vrot.slane %v266, 5
        %v815 = vrot.slane %v814, 4
        %v816 = vrot.slane %v267, 5
        %v817 = vsel %vm715, %v815, %v816
        %v818 = vrot.slane %v816, 4
        %v819 = vrot.slane %v268, 5
        %v820 = vsel %vm715, %v818, %v819
        %v821 = vrot.slane %v269, 5
        %v822 = vrot.slane %v821, 4
        %v823 = vrot.slane %v270, 5
        %v824 = vsel %vm715, %v822, %v823
        %v825 = vrot.slane %v823, 4
        %v826 = vrot.slane %v271, 5
        %v827 = vsel %vm715, %v825, %v826
        %v829 = vshrl.u32 %v272, 16
        %v831 = vrot.slane %v829, 4
        %v832 = vshll.u32 %v272, 16
        %v834 = vrot.slane %v832, 5
        %v835 = vor.u32 %v831, %v834
        %v836 = vrot.slane %v835, 4
        %v838 = vshll.u32 %v273, 16
        %v840 = vrot.slane %v838, 5
        %v841 = vsel %vm280, %v836, %v840
        %v842 = vshrl.u32 %v273, 16
        %v844 = vrot.slane %v842, 4
        %v845 = vor.u32 %v844, %v840
        %v846 = vrot.slane %v845, 4
        %v848 = vshll.u32 %v274, 16
        %v850 = vrot.slane %v848, 5
        %v851 = vsel %vm280, %v846, %v850
        %v855 = vrot.slane %v272, 5
        %v856 = vrot.slane %v855, 4
        %v857 = vrot.slane %v273, 5
        %v858 = vsel %vm715, %v856, %v857
        %v859 = vrot.slane %v857, 4
        %v860 = vrot.slane %v274, 5
        %v861 = vsel %vm715, %v859, %v860
        %v863 = vshrl.u32 %v275, 16
        %v865 = vrot.slane %v863, 4
        %v866 = vshll.u32 %v275, 16
        %v868 = vrot.slane %v866, 5
        %v869 = vor.u32 %v865, %v868
        %v870 = vrot.slane %v869, 4
        %v872 = vshll.u32 %v276, 16
        %v874 = vrot.slane %v872, 5
        %v875 = vsel %vm280, %v870, %v874
        %v876 = vshrl.u32 %v276, 16
        %v878 = vrot.slane %v876, 4
        %v879 = vor.u32 %v878, %v874
        %v880 = vrot.slane %v879, 4
        %v882 = vshll.u32 %v277, 16
        %v884 = vrot.slane %v882, 5
        %v885 = vsel %vm280, %v880, %v884
        %v889 = vrot.slane %v275, 5
        %v890 = vrot.slane %v889, 4
        %v891 = vrot.slane %v276, 5
        %v892 = vsel %vm715, %v890, %v891
        %v893 = vrot.slane %v891, 4
        %v894 = vrot.slane %v277, 5
        %v895 = vsel %vm715, %v893, %v894
        %v896 = vunpack.c.l.b16 %v224
        %v897 = vunpack.c.l.b16 %v225
        %v898 = vunpack.c.l.b16 %v227
        %v899 = vunpack.c.l.b16 %v228
        %v900 = vunpack.c.l.b16 %v230
        %v901 = vunpack.c.l.b16 %v231
        %v902 = vunpack.c.l.b16 %v233
        %v903 = vunpack.c.l.b16 %v234
        %v904 = vunpack.c.l.b16 %v236
        %v905 = vunpack.c.l.b16 %v237
        %v906 = vunpack.c.l.b16 %v239
        %v907 = vunpack.c.l.b16 %v240
        %v908 = vunpack.c.l.b16 %v242
        %v909 = vunpack.c.l.b16 %v243
        %v910 = vunpack.c.l.b16 %v245
        %v911 = vunpack.c.l.b16 %v246
        %v912 = vunpack.c.l.b16 %v248
        %v913 = vunpack.c.l.b16 %v249
        %v914 = vunpack.c.l.b16 %v251
        %v915 = vunpack.c.l.b16 %v252
        %v916 = vunpack.c.l.b16 %v254
        %v917 = vunpack.c.l.b16 %v255
        %v918 = vunpack.c.l.b16 %v257
        %v919 = vunpack.c.l.b16 %v258
        %v920 = vunpack.c.l.b16 %v260
        %v921 = vunpack.c.l.b16 %v261
        %v922 = vunpack.c.l.b16 %v263
        %v923 = vunpack.c.l.b16 %v264
        %v924 = vunpack.c.l.b16 %v266
        %v925 = vunpack.c.l.b16 %v267
        %v926 = vunpack.c.l.b16 %v269
        %v927 = vunpack.c.l.b16 %v270
        %v928 = vpack.c.b16 %v897, %v896
        %v929 = vpack.c.b16 %v899, %v898
        %v930 = vpack.c.b16 %v901, %v900
        %v931 = vpack.c.b16 %v903, %v902
        %v932 = vpack.c.b16 %v905, %v904
        %v933 = vpack.c.b16 %v907, %v906
        %v934 = vpack.c.b16 %v909, %v908
        %v935 = vpack.c.b16 %v911, %v910
        %v936 = vpack.c.b16 %v913, %v912
        %v937 = vpack.c.b16 %v915, %v914
        %v938 = vpack.c.b16 %v917, %v916
        %v939 = vpack.c.b16 %v919, %v918
        %v940 = vpack.c.b16 %v921, %v920
        %v941 = vpack.c.b16 %v923, %v922
        %v942 = vpack.c.b16 %v925, %v924
        %v943 = vpack.c.b16 %v927, %v926
        %v944 = vunpack.c.l.b16 %v294
        %v945 = vunpack.c.l.b16 %v304
        %v946 = vunpack.c.l.b16 %v318
        %v947 = vunpack.c.l.b16 %v328
        %v948 = vunpack.c.l.b16 %v342
        %v949 = vunpack.c.l.b16 %v352
        %v950 = vunpack.c.l.b16 %v366
        %v951 = vunpack.c.l.b16 %v376
        %v952 = vunpack.c.l.b16 %v390
        %v953 = vunpack.c.l.b16 %v400
        %v954 = vunpack.c.l.b16 %v414
        %v955 = vunpack.c.l.b16 %v424
        %v956 = vunpack.c.l.b16 %v438
        %v957 = vunpack.c.l.b16 %v448
        %v958 = vunpack.c.l.b16 %v462
        %v959 = vunpack.c.l.b16 %v472
        %v960 = vunpack.c.l.b16 %v486
        %v961 = vunpack.c.l.b16 %v496
        %v962 = vunpack.c.l.b16 %v510
        %v963 = vunpack.c.l.b16 %v520
        %v964 = vunpack.c.l.b16 %v534
        %v965 = vunpack.c.l.b16 %v544
        %v966 = vunpack.c.l.b16 %v558
        %v967 = vunpack.c.l.b16 %v568
        %v968 = vunpack.c.l.b16 %v582
        %v969 = vunpack.c.l.b16 %v592
        %v970 = vunpack.c.l.b16 %v606
        %v971 = vunpack.c.l.b16 %v616
        %v972 = vunpack.c.l.b16 %v630
        %v973 = vunpack.c.l.b16 %v640
        %v974 = vunpack.c.l.b16 %v654
        %v975 = vunpack.c.l.b16 %v664
        %v976 = vpack.c.b16 %v945, %v944
        %v977 = vpack.c.b16 %v947, %v946
        %v978 = vpack.c.b16 %v949, %v948
        %v979 = vpack.c.b16 %v951, %v950
        %v980 = vpack.c.b16 %v953, %v952
        %v981 = vpack.c.b16 %v955, %v954
        %v982 = vpack.c.b16 %v957, %v956
        %v983 = vpack.c.b16 %v959, %v958
        %v984 = vpack.c.b16 %v961, %v960
        %v985 = vpack.c.b16 %v963, %v962
        %v986 = vpack.c.b16 %v965, %v964
        %v987 = vpack.c.b16 %v967, %v966
        %v988 = vpack.c.b16 %v969, %v968
        %v989 = vpack.c.b16 %v971, %v970
        %v990 = vpack.c.b16 %v973, %v972
        %v991 = vpack.c.b16 %v975, %v974
        %992 = vrot.lane.b32.xlu0 %v976, 4
        %v993 = vpop.permute.xlu0 %992
        %994 = vrot.lane.b32.xlu0 %v977, 4
        %v995 = vpop.permute.xlu0 %994
        %996 = vrot.lane.b32.xlu0 %v978, 4
        %v997 = vpop.permute.xlu0 %996
        %998 = vrot.lane.b32.xlu0 %v979, 4
        %v999 = vpop.permute.xlu0 %998
        %1000 = vrot.lane.b32.xlu0 %v980, 4
        %v1001 = vpop.permute.xlu0 %1000
        %1002 = vrot.lane.b32.xlu0 %v981, 4
        %v1003 = vpop.permute.xlu0 %1002
        %1004 = vrot.lane.b32.xlu0 %v982, 4
        %v1005 = vpop.permute.xlu0 %1004
        %1006 = vrot.lane.b32.xlu0 %v983, 4
        %v1007 = vpop.permute.xlu0 %1006
        %1008 = vrot.lane.b32.xlu0 %v984, 4
        %v1009 = vpop.permute.xlu0 %1008
        %1010 = vrot.lane.b32.xlu0 %v985, 4
        %v1011 = vpop.permute.xlu0 %1010
        %1012 = vrot.lane.b32.xlu0 %v986, 4
        %v1013 = vpop.permute.xlu0 %1012
        %1014 = vrot.lane.b32.xlu0 %v987, 4
        %v1015 = vpop.permute.xlu0 %1014
        %1016 = vrot.lane.b32.xlu0 %v988, 4
        %v1017 = vpop.permute.xlu0 %1016
        %1018 = vrot.lane.b32.xlu0 %v989, 4
        %v1019 = vpop.permute.xlu0 %1018
        %1020 = vrot.lane.b32.xlu0 %v990, 4
        %v1021 = vpop.permute.xlu0 %1020
        %1022 = vrot.lane.b32.xlu0 %v991, 4
        %v1023 = vpop.permute.xlu0 %1022
        %v1024 = vunpack.c.l.b16 %v719
        %v1025 = vunpack.c.l.b16 %v722
        %v1026 = vunpack.c.l.b16 %v726
        %v1027 = vunpack.c.l.b16 %v729
        %v1028 = vunpack.c.l.b16 %v733
        %v1029 = vunpack.c.l.b16 %v736
        %v1030 = vunpack.c.l.b16 %v740
        %v1031 = vunpack.c.l.b16 %v743
        %v1032 = vunpack.c.l.b16 %v747
        %v1033 = vunpack.c.l.b16 %v750
        %v1034 = vunpack.c.l.b16 %v754
        %v1035 = vunpack.c.l.b16 %v757
        %v1036 = vunpack.c.l.b16 %v761
        %v1037 = vunpack.c.l.b16 %v764
        %v1038 = vunpack.c.l.b16 %v768
        %v1039 = vunpack.c.l.b16 %v771
        %v1040 = vunpack.c.l.b16 %v775
        %v1041 = vunpack.c.l.b16 %v778
        %v1042 = vunpack.c.l.b16 %v782
        %v1043 = vunpack.c.l.b16 %v785
        %v1044 = vunpack.c.l.b16 %v789
        %v1045 = vunpack.c.l.b16 %v792
        %v1046 = vunpack.c.l.b16 %v796
        %v1047 = vunpack.c.l.b16 %v799
        %v1048 = vunpack.c.l.b16 %v803
        %v1049 = vunpack.c.l.b16 %v806
        %v1050 = vunpack.c.l.b16 %v810
        %v1051 = vunpack.c.l.b16 %v813
        %v1052 = vunpack.c.l.b16 %v817
        %v1053 = vunpack.c.l.b16 %v820
        %v1054 = vunpack.c.l.b16 %v824
        %v1055 = vunpack.c.l.b16 %v827
        %v1056 = vpack.c.b16 %v1025, %v1024
        %v1057 = vpack.c.b16 %v1027, %v1026
        %v1058 = vpack.c.b16 %v1029, %v1028
        %v1059 = vpack.c.b16 %v1031, %v1030
        %v1060 = vpack.c.b16 %v1033, %v1032
        %v1061 = vpack.c.b16 %v1035, %v1034
        %v1062 = vpack.c.b16 %v1037, %v1036
        %v1063 = vpack.c.b16 %v1039, %v1038
        %v1064 = vpack.c.b16 %v1041, %v1040
        %v1065 = vpack.c.b16 %v1043, %v1042
        %v1066 = vpack.c.b16 %v1045, %v1044
        %v1067 = vpack.c.b16 %v1047, %v1046
        %v1068 = vpack.c.b16 %v1049, %v1048
        %v1069 = vpack.c.b16 %v1051, %v1050
        %v1070 = vpack.c.b16 %v1053, %v1052
        %v1071 = vpack.c.b16 %v1055, %v1054
        %1072 = vrot.lane.b32.xlu0 %v1056, 8
        %v1073 = vpop.permute.xlu0 %1072
        %1074 = vrot.lane.b32.xlu0 %v1057, 8
        %v1075 = vpop.permute.xlu0 %1074
        %1076 = vrot.lane.b32.xlu0 %v1058, 8
        %v1077 = vpop.permute.xlu0 %1076
        %1078 = vrot.lane.b32.xlu0 %v1059, 8
        %v1079 = vpop.permute.xlu0 %1078
        %1080 = vrot.lane.b32.xlu0 %v1060, 8
        %v1081 = vpop.permute.xlu0 %1080
        %1082 = vrot.lane.b32.xlu0 %v1061, 8
        %v1083 = vpop.permute.xlu0 %1082
        %1084 = vrot.lane.b32.xlu0 %v1062, 8
        %v1085 = vpop.permute.xlu0 %1084
        %1086 = vrot.lane.b32.xlu0 %v1063, 8
        %v1087 = vpop.permute.xlu0 %1086
        %1088 = vrot.lane.b32.xlu0 %v1064, 8
        %v1089 = vpop.permute.xlu0 %1088
        %1090 = vrot.lane.b32.xlu0 %v1065, 8
        %v1091 = vpop.permute.xlu0 %1090
        %1092 = vrot.lane.b32.xlu0 %v1066, 8
        %v1093 = vpop.permute.xlu0 %1092
        %1094 = vrot.lane.b32.xlu0 %v1067, 8
        %v1095 = vpop.permute.xlu0 %1094
        %1096 = vrot.lane.b32.xlu0 %v1068, 8
        %v1097 = vpop.permute.xlu0 %1096
        %1098 = vrot.lane.b32.xlu0 %v1069, 8
        %v1099 = vpop.permute.xlu0 %1098
        %1100 = vrot.lane.b32.xlu0 %v1070, 8
        %v1101 = vpop.permute.xlu0 %1100
        %1102 = vrot.lane.b32.xlu0 %v1071, 8
        %v1103 = vpop.permute.xlu0 %1102
        %v1104 = vunpack.c.l.b16 %v272
        %v1105 = vunpack.c.l.b16 %v273
        %v1106 = vpack.c.b16 %v1105, %v1104
        %1107 = vrot.lane.b32.xlu0 %v929, 12
        %v1108 = vpop.permute.xlu0 %1107
        %1109 = vrot.lane.b32.xlu0 %v930, 12
        %v1110 = vpop.permute.xlu0 %1109
        %1111 = vrot.lane.b32.xlu0 %v931, 12
        %v1112 = vpop.permute.xlu0 %1111
        %1113 = vrot.lane.b32.xlu0 %v932, 12
        %v1114 = vpop.permute.xlu0 %1113
        %1115 = vrot.lane.b32.xlu0 %v933, 12
        %v1116 = vpop.permute.xlu0 %1115
        %1117 = vrot.lane.b32.xlu0 %v934, 12
        %v1118 = vpop.permute.xlu0 %1117
        %1119 = vrot.lane.b32.xlu0 %v935, 12
        %v1120 = vpop.permute.xlu0 %1119
        %1121 = vrot.lane.b32.xlu0 %v936, 12
        %v1122 = vpop.permute.xlu0 %1121
        %1123 = vrot.lane.b32.xlu0 %v937, 12
        %v1124 = vpop.permute.xlu0 %1123
        %1125 = vrot.lane.b32.xlu0 %v938, 12
        %v1126 = vpop.permute.xlu0 %1125
        %1127 = vrot.lane.b32.xlu0 %v939, 12
        %v1128 = vpop.permute.xlu0 %1127
        %1129 = vrot.lane.b32.xlu0 %v940, 12
        %v1130 = vpop.permute.xlu0 %1129
        %1131 = vrot.lane.b32.xlu0 %v941, 12
        %v1132 = vpop.permute.xlu0 %1131
        %1133 = vrot.lane.b32.xlu0 %v942, 12
        %v1134 = vpop.permute.xlu0 %1133
        %1135 = vrot.lane.b32.xlu0 %v943, 12
        %v1136 = vpop.permute.xlu0 %1135
        %1137 = vrot.lane.b32.xlu0 %v1106, 12
        %v1138 = vpop.permute.xlu0 %1137
        %v1139 = vunpack.c.l.b16 %v841
        %v1140 = vunpack.c.l.b16 %v851
        %v1141 = vpack.c.b16 %v1140, %v1139
        %1142 = vrot.lane.b32.xlu0 %v977, 16
        %v1143 = vpop.permute.xlu0 %1142
        %1144 = vrot.lane.b32.xlu0 %v978, 16
        %v1145 = vpop.permute.xlu0 %1144
        %1146 = vrot.lane.b32.xlu0 %v979, 16
        %v1147 = vpop.permute.xlu0 %1146
        %1148 = vrot.lane.b32.xlu0 %v980, 16
        %v1149 = vpop.permute.xlu0 %1148
        %1150 = vrot.lane.b32.xlu0 %v981, 16
        %v1151 = vpop.permute.xlu0 %1150
        %1152 = vrot.lane.b32.xlu0 %v982, 16
        %v1153 = vpop.permute.xlu0 %1152
        %1154 = vrot.lane.b32.xlu0 %v983, 16
        %v1155 = vpop.permute.xlu0 %1154
        %1156 = vrot.lane.b32.xlu0 %v984, 16
        %v1157 = vpop.permute.xlu0 %1156
        %1158 = vrot.lane.b32.xlu0 %v985, 16
        %v1159 = vpop.permute.xlu0 %1158
        %1160 = vrot.lane.b32.xlu0 %v986, 16
        %v1161 = vpop.permute.xlu0 %1160
        %1162 = vrot.lane.b32.xlu0 %v987, 16
        %v1163 = vpop.permute.xlu0 %1162
        %1164 = vrot.lane.b32.xlu0 %v988, 16
        %v1165 = vpop.permute.xlu0 %1164
        %1166 = vrot.lane.b32.xlu0 %v989, 16
        %v1167 = vpop.permute.xlu0 %1166
        %1168 = vrot.lane.b32.xlu0 %v990, 16
        %v1169 = vpop.permute.xlu0 %1168
        %1170 = vrot.lane.b32.xlu0 %v991, 16
        %v1171 = vpop.permute.xlu0 %1170
        %1172 = vrot.lane.b32.xlu0 %v1141, 16
        %v1173 = vpop.permute.xlu0 %1172
        %v1174 = vunpack.c.l.b16 %v858
        %v1175 = vunpack.c.l.b16 %v861
        %v1176 = vpack.c.b16 %v1175, %v1174
        %1177 = vrot.lane.b32.xlu0 %v1057, 20
        %v1178 = vpop.permute.xlu0 %1177
        %1179 = vrot.lane.b32.xlu0 %v1058, 20
        %v1180 = vpop.permute.xlu0 %1179
        %1181 = vrot.lane.b32.xlu0 %v1059, 20
        %v1182 = vpop.permute.xlu0 %1181
        %1183 = vrot.lane.b32.xlu0 %v1060, 20
        %v1184 = vpop.permute.xlu0 %1183
        %1185 = vrot.lane.b32.xlu0 %v1061, 20
        %v1186 = vpop.permute.xlu0 %1185
        %1187 = vrot.lane.b32.xlu0 %v1062, 20
        %v1188 = vpop.permute.xlu0 %1187
        %1189 = vrot.lane.b32.xlu0 %v1063, 20
        %v1190 = vpop.permute.xlu0 %1189
        %1191 = vrot.lane.b32.xlu0 %v1064, 20
        %v1192 = vpop.permute.xlu0 %1191
        %1193 = vrot.lane.b32.xlu0 %v1065, 20
        %v1194 = vpop.permute.xlu0 %1193
        %1195 = vrot.lane.b32.xlu0 %v1066, 20
        %v1196 = vpop.permute.xlu0 %1195
        %1197 = vrot.lane.b32.xlu0 %v1067, 20
        %v1198 = vpop.permute.xlu0 %1197
        %1199 = vrot.lane.b32.xlu0 %v1068, 20
        %v1200 = vpop.permute.xlu0 %1199
        %1201 = vrot.lane.b32.xlu0 %v1069, 20
        %v1202 = vpop.permute.xlu0 %1201
        %1203 = vrot.lane.b32.xlu0 %v1070, 20
        %v1204 = vpop.permute.xlu0 %1203
        %1205 = vrot.lane.b32.xlu0 %v1071, 20
        %v1206 = vpop.permute.xlu0 %1205
        %1207 = vrot.lane.b32.xlu0 %v1176, 20
        %v1208 = vpop.permute.xlu0 %1207
        %v1209 = vunpack.c.l.b16 %v275
        %v1210 = vunpack.c.l.b16 %v276
        %v1211 = vpack.c.b16 %v1210, %v1209
        %1212 = vrot.lane.b32.xlu0 %v930, 24
        %v1213 = vpop.permute.xlu0 %1212
        %1214 = vrot.lane.b32.xlu0 %v931, 24
        %v1215 = vpop.permute.xlu0 %1214
        %1216 = vrot.lane.b32.xlu0 %v932, 24
        %v1217 = vpop.permute.xlu0 %1216
        %1218 = vrot.lane.b32.xlu0 %v933, 24
        %v1219 = vpop.permute.xlu0 %1218
        %1220 = vrot.lane.b32.xlu0 %v934, 24
        %v1221 = vpop.permute.xlu0 %1220
        %1222 = vrot.lane.b32.xlu0 %v935, 24
        %v1223 = vpop.permute.xlu0 %1222
        %1224 = vrot.lane.b32.xlu0 %v936, 24
        %v1225 = vpop.permute.xlu0 %1224
        %1226 = vrot.lane.b32.xlu0 %v937, 24
        %v1227 = vpop.permute.xlu0 %1226
        %1228 = vrot.lane.b32.xlu0 %v938, 24
        %v1229 = vpop.permute.xlu0 %1228
        %1230 = vrot.lane.b32.xlu0 %v939, 24
        %v1231 = vpop.permute.xlu0 %1230
        %1232 = vrot.lane.b32.xlu0 %v940, 24
        %v1233 = vpop.permute.xlu0 %1232
        %1234 = vrot.lane.b32.xlu0 %v941, 24
        %v1235 = vpop.permute.xlu0 %1234
        %1236 = vrot.lane.b32.xlu0 %v942, 24
        %v1237 = vpop.permute.xlu0 %1236
        %1238 = vrot.lane.b32.xlu0 %v943, 24
        %v1239 = vpop.permute.xlu0 %1238
        %1240 = vrot.lane.b32.xlu0 %v1106, 24
        %v1241 = vpop.permute.xlu0 %1240
        %1242 = vrot.lane.b32.xlu0 %v1211, 24
        %v1243 = vpop.permute.xlu0 %1242
        %v1244 = vunpack.c.l.b16 %v875
        %v1245 = vunpack.c.l.b16 %v885
        %v1246 = vpack.c.b16 %v1245, %v1244
        %1247 = vrot.lane.b32.xlu0 %v978, 28
        %v1248 = vpop.permute.xlu0 %1247
        %1249 = vrot.lane.b32.xlu0 %v979, 28
        %v1250 = vpop.permute.xlu0 %1249
        %1251 = vrot.lane.b32.xlu0 %v980, 28
        %v1252 = vpop.permute.xlu0 %1251
        %1253 = vrot.lane.b32.xlu0 %v981, 28
        %v1254 = vpop.permute.xlu0 %1253
        %1255 = vrot.lane.b32.xlu0 %v982, 28
        %v1256 = vpop.permute.xlu0 %1255
        %1257 = vrot.lane.b32.xlu0 %v983, 28
        %v1258 = vpop.permute.xlu0 %1257
        %1259 = vrot.lane.b32.xlu0 %v984, 28
        %v1260 = vpop.permute.xlu0 %1259
        %1261 = vrot.lane.b32.xlu0 %v985, 28
        %v1262 = vpop.permute.xlu0 %1261
        %1263 = vrot.lane.b32.xlu0 %v986, 28
        %v1264 = vpop.permute.xlu0 %1263
        %1265 = vrot.lane.b32.xlu0 %v987, 28
        %v1266 = vpop.permute.xlu0 %1265
        %1267 = vrot.lane.b32.xlu0 %v988, 28
        %v1268 = vpop.permute.xlu0 %1267
        %1269 = vrot.lane.b32.xlu0 %v989, 28
        %v1270 = vpop.permute.xlu0 %1269
        %1271 = vrot.lane.b32.xlu0 %v990, 28
        %v1272 = vpop.permute.xlu0 %1271
        %1273 = vrot.lane.b32.xlu0 %v991, 28
        %v1274 = vpop.permute.xlu0 %1273
        %1275 = vrot.lane.b32.xlu0 %v1141, 28
        %v1276 = vpop.permute.xlu0 %1275
        %1277 = vrot.lane.b32.xlu0 %v1246, 28
        %v1278 = vpop.permute.xlu0 %1277
        %v1279 = vunpack.c.l.b16 %v892
        %v1280 = vunpack.c.l.b16 %v895
        %v1281 = vpack.c.b16 %v1280, %v1279
        %1282 = vrot.lane.b32.xlu0 %v1058, 32
        %v1283 = vpop.permute.xlu0 %1282
        %1284 = vrot.lane.b32.xlu0 %v1059, 32
        %v1285 = vpop.permute.xlu0 %1284
        %1286 = vrot.lane.b32.xlu0 %v1060, 32
        %v1287 = vpop.permute.xlu0 %1286
        %1288 = vrot.lane.b32.xlu0 %v1061, 32
        %v1289 = vpop.permute.xlu0 %1288
        %1290 = vrot.lane.b32.xlu0 %v1062, 32
        %v1291 = vpop.permute.xlu0 %1290
        %1292 = vrot.lane.b32.xlu0 %v1063, 32
        %v1293 = vpop.permute.xlu0 %1292
        %1294 = vrot.lane.b32.xlu0 %v1064, 32
        %v1295 = vpop.permute.xlu0 %1294
        %1296 = vrot.lane.b32.xlu0 %v1065, 32
        %v1297 = vpop.permute.xlu0 %1296
        %1298 = vrot.lane.b32.xlu0 %v1066, 32
        %v1299 = vpop.permute.xlu0 %1298
        %1300 = vrot.lane.b32.xlu0 %v1067, 32
        %v1301 = vpop.permute.xlu0 %1300
        %1302 = vrot.lane.b32.xlu0 %v1068, 32
        %v1303 = vpop.permute.xlu0 %1302
        %1304 = vrot.lane.b32.xlu0 %v1069, 32
        %v1305 = vpop.permute.xlu0 %1304
        %1306 = vrot.lane.b32.xlu0 %v1070, 32
        %v1307 = vpop.permute.xlu0 %1306
        %1308 = vrot.lane.b32.xlu0 %v1071, 32
        %v1309 = vpop.permute.xlu0 %1308
        %1310 = vrot.lane.b32.xlu0 %v1176, 32
        %v1311 = vpop.permute.xlu0 %1310
        %1312 = vrot.lane.b32.xlu0 %v1281, 32
        %v1313 = vpop.permute.xlu0 %1312
        %vm1314 = vcmask 31744
        %v1317 = vsel %vm1314, %v928, %v993
        %v1320 = vsel %vm1314, %v929, %v995
        %v1323 = vsel %vm1314, %v930, %v997
        %v1326 = vsel %vm1314, %v931, %v999
        %v1329 = vsel %vm1314, %v932, %v1001
        %v1332 = vsel %vm1314, %v933, %v1003
        %v1335 = vsel %vm1314, %v934, %v1005
        %v1338 = vsel %vm1314, %v935, %v1007
        %v1341 = vsel %vm1314, %v936, %v1009
        %v1344 = vsel %vm1314, %v937, %v1011
        %v1347 = vsel %vm1314, %v938, %v1013
        %v1350 = vsel %vm1314, %v939, %v1015
        %v1353 = vsel %vm1314, %v940, %v1017
        %v1356 = vsel %vm1314, %v941, %v1019
        %v1359 = vsel %vm1314, %v942, %v1021
        %v1362 = vsel %vm1314, %v943, %v1023
        %vm1363 = vcmask 64512
        %v1365 = vsel %vm1363, %v1317, %v1073
        %v1367 = vsel %vm1363, %v1320, %v1075
        %v1369 = vsel %vm1363, %v1323, %v1077
        %v1371 = vsel %vm1363, %v1326, %v1079
        %v1373 = vsel %vm1363, %v1329, %v1081
        %v1375 = vsel %vm1363, %v1332, %v1083
        %v1377 = vsel %vm1363, %v1335, %v1085
        %v1379 = vsel %vm1363, %v1338, %v1087
        %v1381 = vsel %vm1363, %v1341, %v1089
        %v1383 = vsel %vm1363, %v1344, %v1091
        %v1385 = vsel %vm1363, %v1347, %v1093
        %v1387 = vsel %vm1363, %v1350, %v1095
        %v1389 = vsel %vm1363, %v1353, %v1097
        %v1391 = vsel %vm1363, %v1356, %v1099
        %v1393 = vsel %vm1363, %v1359, %v1101
        %v1395 = vsel %vm1363, %v1362, %v1103
        %vm1396 = vcmask 97280
        %v1398 = vsel %vm1396, %v1365, %v1108
        %v1400 = vsel %vm1396, %v1367, %v1110
        %v1402 = vsel %vm1396, %v1369, %v1112
        %v1404 = vsel %vm1396, %v1371, %v1114
        %v1406 = vsel %vm1396, %v1373, %v1116
        %v1408 = vsel %vm1396, %v1375, %v1118
        %v1410 = vsel %vm1396, %v1377, %v1120
        %v1412 = vsel %vm1396, %v1379, %v1122
        %v1414 = vsel %vm1396, %v1381, %v1124
        %v1416 = vsel %vm1396, %v1383, %v1126
        %v1418 = vsel %vm1396, %v1385, %v1128
        %v1420 = vsel %vm1396, %v1387, %v1130
        %v1422 = vsel %vm1396, %v1389, %v1132
        %v1424 = vsel %vm1396, %v1391, %v1134
        %v1426 = vsel %vm1396, %v1393, %v1136
        %v1428 = vsel %vm1396, %v1395, %v1138
        %vm1429 = vcmask 130048
        %v1431 = vsel %vm1429, %v1398, %v1143
        %v1433 = vsel %vm1429, %v1400, %v1145
        %v1435 = vsel %vm1429, %v1402, %v1147
        %v1437 = vsel %vm1429, %v1404, %v1149
        %v1439 = vsel %vm1429, %v1406, %v1151
        %v1441 = vsel %vm1429, %v1408, %v1153
        %v1443 = vsel %vm1429, %v1410, %v1155
        %v1445 = vsel %vm1429, %v1412, %v1157
        %v1447 = vsel %vm1429, %v1414, %v1159
        %v1449 = vsel %vm1429, %v1416, %v1161
        %v1451 = vsel %vm1429, %v1418, %v1163
        %v1453 = vsel %vm1429, %v1420, %v1165
        %v1455 = vsel %vm1429, %v1422, %v1167
        %v1457 = vsel %vm1429, %v1424, %v1169
        %v1459 = vsel %vm1429, %v1426, %v1171
        %v1461 = vsel %vm1429, %v1428, %v1173
        %vm1462 = vcmask 162816
        %v1464 = vsel %vm1462, %v1431, %v1178
        %v1466 = vsel %vm1462, %v1433, %v1180
        %v1468 = vsel %vm1462, %v1435, %v1182
        %v1470 = vsel %vm1462, %v1437, %v1184
        %v1472 = vsel %vm1462, %v1439, %v1186
        %v1474 = vsel %vm1462, %v1441, %v1188
        %v1476 = vsel %vm1462, %v1443, %v1190
        %v1478 = vsel %vm1462, %v1445, %v1192
        %v1480 = vsel %vm1462, %v1447, %v1194
        %v1482 = vsel %vm1462, %v1449, %v1196
        %v1484 = vsel %vm1462, %v1451, %v1198
        %v1486 = vsel %vm1462, %v1453, %v1200
        %v1488 = vsel %vm1462, %v1455, %v1202
        %v1490 = vsel %vm1462, %v1457, %v1204
        %v1492 = vsel %vm1462, %v1459, %v1206
        %v1494 = vsel %vm1462, %v1461, %v1208
        %vm1495 = vcmask 195584
        %v1497 = vsel %vm1495, %v1464, %v1213
        %v1499 = vsel %vm1495, %v1466, %v1215
        %v1501 = vsel %vm1495, %v1468, %v1217
        %v1503 = vsel %vm1495, %v1470, %v1219
        %v1505 = vsel %vm1495, %v1472, %v1221
        %v1507 = vsel %vm1495, %v1474, %v1223
        %v1509 = vsel %vm1495, %v1476, %v1225
        %v1511 = vsel %vm1495, %v1478, %v1227
        %v1513 = vsel %vm1495, %v1480, %v1229
        %v1515 = vsel %vm1495, %v1482, %v1231
        %v1517 = vsel %vm1495, %v1484, %v1233
        %v1519 = vsel %vm1495, %v1486, %v1235
        %v1521 = vsel %vm1495, %v1488, %v1237
        %v1523 = vsel %vm1495, %v1490, %v1239
        %v1525 = vsel %vm1495, %v1492, %v1241
        %v1527 = vsel %vm1495, %v1494, %v1243
        %vm1528 = vcmask 228352
        %v1530 = vsel %vm1528, %v1497, %v1248
        %v1532 = vsel %vm1528, %v1499, %v1250
        %v1534 = vsel %vm1528, %v1501, %v1252
        %v1536 = vsel %vm1528, %v1503, %v1254
        %v1538 = vsel %vm1528, %v1505, %v1256
        %v1540 = vsel %vm1528, %v1507, %v1258
        %v1542 = vsel %vm1528, %v1509, %v1260
        %v1544 = vsel %vm1528, %v1511, %v1262
        %v1546 = vsel %vm1528, %v1513, %v1264
        %v1548 = vsel %vm1528, %v1515, %v1266
        %v1550 = vsel %vm1528, %v1517, %v1268
        %v1552 = vsel %vm1528, %v1519, %v1270
        %v1554 = vsel %vm1528, %v1521, %v1272
        %v1556 = vsel %vm1528, %v1523, %v1274
        %v1558 = vsel %vm1528, %v1525, %v1276
        %v1560 = vsel %vm1528, %v1527, %v1278
        %vm1561 = vcmask 261120
        %v1563 = vsel %vm1561, %v1530, %v1283
        %v1565 = vsel %vm1561, %v1532, %v1285
        %v1567 = vsel %vm1561, %v1534, %v1287
        %v1569 = vsel %vm1561, %v1536, %v1289
        %v1571 = vsel %vm1561, %v1538, %v1291
        %v1573 = vsel %vm1561, %v1540, %v1293
        %v1575 = vsel %vm1561, %v1542, %v1295
        %v1577 = vsel %vm1561, %v1544, %v1297
        %v1579 = vsel %vm1561, %v1546, %v1299
        %v1581 = vsel %vm1561, %v1548, %v1301
        %v1583 = vsel %vm1561, %v1550, %v1303
        %v1585 = vsel %vm1561, %v1552, %v1305
        %v1587 = vsel %vm1561, %v1554, %v1307
        %v1589 = vsel %vm1561, %v1556, %v1309
        %v1591 = vsel %vm1561, %v1558, %v1311
        %v1593 = vsel %vm1561, %v1560, %v1313
        %v1594 = vld [vmem:[%s1] sm:$0xf]
        %v1595 = vld [vmem:[%s1 + $0x4] sm:$0xf]
        %v1596 = vld [vmem:[%s1 + $0x8] sm:$0xf]
        %v1597 = vld [vmem:[%s1 + $0xc] sm:$0xf]
        %v1598 = vld [vmem:[%s1 + $0x10] sm:$0x3]
        %v1599 = vld [vmem:[%s2] sm:$0x1]
        %v1601 = vlaneseq
        %v1602 = vshrl.u32 %v1601, 7
        %v1603 = vsub.s32 0, %v1602
        %v1604 = vrot.slane %v1599, %v1603
        %v1611 = vunpack.c.l.b16 %v1594
        %v1612 = vunpack.c.l.b16 %v1595
        %v1613 = vunpack.c.l.b16 %v1596
        %v1614 = vunpack.c.l.b16 %v1597
        %v1615 = vunpack.c.l.b16 %v1598
        %v1616 = vpack.c.b16 %v1612, %v1611
        %v1617 = vpack.c.b16 %v1614, %v1613
        %v1618 = vpack.c.b16 %v1615, %v1615
        %vm1621 = vcmask 293888
        %v1622 = vsel %vm1621, %v1563, 0
        %v1624 = vsel %vm1621, %v1565, 0
        %v1626 = vsel %vm1621, %v1567, 0
        %v1628 = vsel %vm1621, %v1569, 0
        %v1630 = vsel %vm1621, %v1571, 0
        %v1632 = vsel %vm1621, %v1573, 0
        %v1634 = vsel %vm1621, %v1575, 0
        %v1636 = vsel %vm1621, %v1577, 0
        %v1638 = vsel %vm1621, %v1579, 0
        %v1640 = vsel %vm1621, %v1581, 0
        %v1642 = vsel %vm1621, %v1583, 0
        %v1644 = vsel %vm1621, %v1585, 0
        %v1646 = vsel %vm1621, %v1587, 0
        %v1648 = vsel %vm1621, %v1589, 0
        %v1650 = vsel %vm1621, %v1591, 0
        %v1652 = vsel %vm1621, %v1593, 0
        %vm1654 = vcmask 1041408
        %v1656 = vsel %vm1654, %v1618, 0
        %1658 = vmatprep.subr.bf16.mxu0 0
        %1659 = vmatpush1.bf16.msra.mxu0 %v1616
        %1660 = vmatprep.subr.bf16.mxu0 0
        %1661 = vmatpush1.bf16.msra.mxu0 %v1617
        %1662 = vmatprep.subr.bf16.mxu0 0
        %1663 = vmatpush1.bf16.msra.mxu0 %v1656
        %1664 = vmatprep.subr.bf16.mxu0 0
        %1665 = vmatpush1.bf16.msra.mxu0 0
        %1666 = vmatprep.subr.bf16.mxu0 0
        %1667 = vmatpush1.bf16.msra.mxu0 0
        %1668 = vmatprep.subr.bf16.mxu0 0
        %1669 = vmatpush1.bf16.msra.mxu0 0
        %1670 = vmatprep.subr.bf16.mxu0 0
        %1671 = vmatpush1.bf16.msra.mxu0 0
        %1672 = vmatprep.subr.bf16.mxu0 0
        %1673 = vmatpush1.bf16.msra.mxu0 0
        %1674 = vmatprep.subr.bf16.mxu0 0
        %1675 = vmatpush1.bf16.msra.mxu0 0
        %1676 = vmatprep.subr.bf16.mxu0 0
        %1677 = vmatpush1.bf16.msra.mxu0 0
        %1678 = vmatprep.subr.bf16.mxu0 0
        %1679 = vmatpush1.bf16.msra.mxu0 0
        %1680 = vmatprep.subr.bf16.mxu0 0
        %1681 = vmatpush1.bf16.msra.mxu0 0
        %1682 = vmatprep.subr.bf16.mxu0 0
        %1683 = vmatpush1.bf16.msra.mxu0 0
        %1684 = vmatprep.subr.bf16.mxu0 0
        %1685 = vmatpush1.bf16.msra.mxu0 0
        %1686 = vmatprep.subr.bf16.mxu0 0
        %1687 = vmatpush1.bf16.msra.mxu0 0
        %1688 = vmatprep.subr.bf16.mxu0 0
        %1689 = vmatpush1.bf16.msra.mxu0 0
        %1690 = vmatprep.mubr.bf16.mxu0 0
        %1691 = vmatmul.mubr.bf16.gmra.mrb[0].mxu0 %v1622
        %v1692 = vpop.f32.mrb[0].mxu0
        %v1693 = vadd.f32 %v1604, %v1692
        %v1694 = vpop.f32.mrb[0].mxu0
        %v1695 = vpop.f32.mrb[0].mxu0
        %v1696 = vadd.f32 %v1604, %v1695
        %v1697 = vpop.f32.mrb[0].mxu0
        %1698 = vmatprep.mubr.bf16.mxu0 0
        %1699 = vmatmul.mubr.bf16.gmra.mrb[0].mxu0 %v1624
        %v1700 = vpop.f32.mrb[0].mxu0
        %v1701 = vadd.f32 %v1604, %v1700
        %v1702 = vpop.f32.mrb[0].mxu0
        %v1703 = vpop.f32.mrb[0].mxu0
        %v1704 = vadd.f32 %v1604, %v1703
        %v1705 = vpop.f32.mrb[0].mxu0
        %1706 = vmatprep.mubr.bf16.mxu0 0
        %1707 = vmatmul.mubr.bf16.gmra.mrb[0].mxu0 %v1626
        %v1708 = vpop.f32.mrb[0].mxu0
        %v1709 = vadd.f32 %v1604, %v1708
        %v1710 = vpop.f32.mrb[0].mxu0
        %v1711 = vpop.f32.mrb[0].mxu0
        %v1712 = vadd.f32 %v1604, %v1711
        %v1713 = vpop.f32.mrb[0].mxu0
        %1714 = vmatprep.mubr.bf16.mxu0 0
        %1715 = vmatmul.mubr.bf16.gmra.mrb[0].mxu0 %v1628
        %v1716 = vpop.f32.mrb[0].mxu0
        %v1717 = vadd.f32 %v1604, %v1716
        %v1718 = vpop.f32.mrb[0].mxu0
        %v1719 = vpop.f32.mrb[0].mxu0
        %v1720 = vadd.f32 %v1604, %v1719
        %v1721 = vpop.f32.mrb[0].mxu0
        %1722 = vmatprep.mubr.bf16.mxu0 0
        %1723 = vmatmul.mubr.bf16.gmra.mrb[0].mxu0 %v1630
        %v1724 = vpop.f32.mrb[0].mxu0
        %v1725 = vadd.f32 %v1604, %v1724
        %v1726 = vpop.f32.mrb[0].mxu0
        %v1727 = vpop.f32.mrb[0].mxu0
        %v1728 = vadd.f32 %v1604, %v1727
        %v1729 = vpop.f32.mrb[0].mxu0
        %1730 = vmatprep.mubr.bf16.mxu0 0
        %1731 = vmatmul.mubr.bf16.gmra.mrb[0].mxu0 %v1632
        %v1732 = vpop.f32.mrb[0].mxu0
        %v1733 = vadd.f32 %v1604, %v1732
        %v1734 = vpop.f32.mrb[0].mxu0
        %v1735 = vpop.f32.mrb[0].mxu0
        %v1736 = vadd.f32 %v1604, %v1735
        %v1737 = vpop.f32.mrb[0].mxu0
        %1738 = vmatprep.mubr.bf16.mxu0 0
        %1739 = vmatmul.mubr.bf16.gmra.mrb[0].mxu0 %v1634
        %v1740 = vpop.f32.mrb[0].mxu0
        %v1741 = vadd.f32 %v1604, %v1740
        %v1742 = vpop.f32.mrb[0].mxu0
        %v1743 = vpop.f32.mrb[0].mxu0
        %v1744 = vadd.f32 %v1604, %v1743
        %v1745 = vpop.f32.mrb[0].mxu0
        %1746 = vmatprep.mubr.bf16.mxu0 0
        %1747 = vmatmul.mubr.bf16.gmra.mrb[0].mxu0 %v1636
        %v1748 = vpop.f32.mrb[0].mxu0
        %v1749 = vadd.f32 %v1604, %v1748
        %v1750 = vpop.f32.mrb[0].mxu0
        %v1751 = vpop.f32.mrb[0].mxu0
        %v1752 = vadd.f32 %v1604, %v1751
        %v1753 = vpop.f32.mrb[0].mxu0
        %1754 = vmatprep.mubr.bf16.mxu0 0
        %1755 = vmatmul.mubr.bf16.gmra.mrb[0].mxu0 %v1638
        %v1756 = vpop.f32.mrb[0].mxu0
        %v1757 = vadd.f32 %v1604, %v1756
        %v1758 = vpop.f32.mrb[0].mxu0
        %v1759 = vpop.f32.mrb[0].mxu0
        %v1760 = vadd.f32 %v1604, %v1759
        %v1761 = vpop.f32.mrb[0].mxu0
        %1762 = vmatprep.mubr.bf16.mxu0 0
        %1763 = vmatmul.mubr.bf16.gmra.mrb[0].mxu0 %v1640
        %v1764 = vpop.f32.mrb[0].mxu0
        %v1765 = vadd.f32 %v1604, %v1764
        %v1766 = vpop.f32.mrb[0].mxu0
        %v1767 = vpop.f32.mrb[0].mxu0
        %v1768 = vadd.f32 %v1604, %v1767
        %v1769 = vpop.f32.mrb[0].mxu0
        %1770 = vmatprep.mubr.bf16.mxu0 0
        %1771 = vmatmul.mubr.bf16.gmra.mrb[0].mxu0 %v1642
        %v1772 = vpop.f32.mrb[0].mxu0
        %v1773 = vadd.f32 %v1604, %v1772
        %v1774 = vpop.f32.mrb[0].mxu0
        %v1775 = vpop.f32.mrb[0].mxu0
        %v1776 = vadd.f32 %v1604, %v1775
        %v1777 = vpop.f32.mrb[0].mxu0
        %1778 = vmatprep.mubr.bf16.mxu0 0
        %1779 = vmatmul.mubr.bf16.gmra.mrb[0].mxu0 %v1644
        %v1780 = vpop.f32.mrb[0].mxu0
        %v1781 = vadd.f32 %v1604, %v1780
        %v1782 = vpop.f32.mrb[0].mxu0
        %v1783 = vpop.f32.mrb[0].mxu0
        %v1784 = vadd.f32 %v1604, %v1783
        %v1785 = vpop.f32.mrb[0].mxu0
        %1786 = vmatprep.mubr.bf16.mxu0 0
        %1787 = vmatmul.mubr.bf16.gmra.mrb[0].mxu0 %v1646
        %v1788 = vpop.f32.mrb[0].mxu0
        %v1789 = vadd.f32 %v1604, %v1788
        %v1790 = vpop.f32.mrb[0].mxu0
        %v1791 = vpop.f32.mrb[0].mxu0
        %v1792 = vadd.f32 %v1604, %v1791
        %v1793 = vpop.f32.mrb[0].mxu0
        %1794 = vmatprep.mubr.bf16.mxu0 0
        %1795 = vmatmul.mubr.bf16.gmra.mrb[0].mxu0 %v1648
        %v1796 = vpop.f32.mrb[0].mxu0
        %v1797 = vadd.f32 %v1604, %v1796
        %v1798 = vpop.f32.mrb[0].mxu0
        %v1799 = vpop.f32.mrb[0].mxu0
        %v1800 = vadd.f32 %v1604, %v1799
        %v1801 = vpop.f32.mrb[0].mxu0
        %1802 = vmatprep.mubr.bf16.mxu0 0
        %1803 = vmatmul.mubr.bf16.gmra.mrb[0].mxu0 %v1650
        %v1804 = vpop.f32.mrb[0].mxu0
        %v1805 = vadd.f32 %v1604, %v1804
        %v1806 = vpop.f32.mrb[0].mxu0
        %v1807 = vpop.f32.mrb[0].mxu0
        %v1808 = vadd.f32 %v1604, %v1807
        %v1809 = vpop.f32.mrb[0].mxu0
        %1810 = vmatprep.mubr.bf16.mxu0 0
        %1811 = vmatmul.mubr.bf16.gmra.mrb[0].mxu0 %v1652
        %v1812 = vpop.f32.mrb[0].mxu0
        %v1813 = vadd.f32 %v1604, %v1812
        %v1814 = vpop.f32.mrb[0].mxu0
        %v1815 = vpop.f32.mrb[0].mxu0
        %v1816 = vadd.f32 %v1604, %v1815
        %v1817 = vpop.f32.mrb[0].mxu0
        %1818 = vdwg.mxu0
        %vm1819 = vcmp.gt.f32.partialorder %v1693, 0.0
        %vm1820 = vcmp.gt.f32.partialorder %v1696, 0.0
        %vm1821 = vcmp.gt.f32.partialorder %v1701, 0.0
        %vm1822 = vcmp.gt.f32.partialorder %v1704, 0.0
        %vm1823 = vcmp.gt.f32.partialorder %v1709, 0.0
        %vm1824 = vcmp.gt.f32.partialorder %v1712, 0.0
        %vm1825 = vcmp.gt.f32.partialorder %v1717, 0.0
        %vm1826 = vcmp.gt.f32.partialorder %v1720, 0.0
        %vm1827 = vcmp.gt.f32.partialorder %v1725, 0.0
        %vm1828 = vcmp.gt.f32.partialorder %v1728, 0.0
        %vm1829 = vcmp.gt.f32.partialorder %v1733, 0.0
        %vm1830 = vcmp.gt.f32.partialorder %v1736, 0.0
        %vm1831 = vcmp.gt.f32.partialorder %v1741, 0.0
        %vm1832 = vcmp.gt.f32.partialorder %v1744, 0.0
        %vm1833 = vcmp.gt.f32.partialorder %v1749, 0.0
        %vm1834 = vcmp.gt.f32.partialorder %v1752, 0.0
        %vm1835 = vcmp.gt.f32.partialorder %v1757, 0.0
        %vm1836 = vcmp.gt.f32.partialorder %v1760, 0.0
        %vm1837 = vcmp.gt.f32.partialorder %v1765, 0.0
        %vm1838 = vcmp.gt.f32.partialorder %v1768, 0.0
        %vm1839 = vcmp.gt.f32.partialorder %v1773, 0.0
        %vm1840 = vcmp.gt.f32.partialorder %v1776, 0.0
        %vm1841 = vcmp.gt.f32.partialorder %v1781, 0.0
        %vm1842 = vcmp.gt.f32.partialorder %v1784, 0.0
        %vm1843 = vcmp.gt.f32.partialorder %v1789, 0.0
        %vm1844 = vcmp.gt.f32.partialorder %v1792, 0.0
        %vm1845 = vcmp.gt.f32.partialorder %v1797, 0.0
        %vm1846 = vcmp.gt.f32.partialorder %v1800, 0.0
        %vm1847 = vcmp.gt.f32.partialorder %v1805, 0.0
        %vm1848 = vcmp.gt.f32.partialorder %v1808, 0.0
        %vm1849 = vcmp.gt.f32.partialorder %v1813, 0.0
        %vm1850 = vcmp.gt.f32.partialorder %v1816, 0.0
        %v1851 = vmul.f32 %v1693, 0.01
        %v1852 = vmul.f32 %v1696, 0.01
        %v1853 = vmul.f32 %v1701, 0.01
        %v1854 = vmul.f32 %v1704, 0.01
        %v1855 = vmul.f32 %v1709, 0.01
        %v1856 = vmul.f32 %v1712, 0.01
        %v1857 = vmul.f32 %v1717, 0.01
        %v1858 = vmul.f32 %v1720, 0.01
        %v1859 = vmul.f32 %v1725, 0.01
        %v1860 = vmul.f32 %v1728, 0.01
        %v1861 = vmul.f32 %v1733, 0.01
        %v1862 = vmul.f32 %v1736, 0.01
        %v1863 = vmul.f32 %v1741, 0.01
        %v1864 = vmul.f32 %v1744, 0.01
        %v1865 = vmul.f32 %v1749, 0.01
        %v1866 = vmul.f32 %v1752, 0.01
        %v1867 = vmul.f32 %v1757, 0.01
        %v1868 = vmul.f32 %v1760, 0.01
        %v1869 = vmul.f32 %v1765, 0.01
        %v1870 = vmul.f32 %v1768, 0.01
        %v1871 = vmul.f32 %v1773, 0.01
        %v1872 = vmul.f32 %v1776, 0.01
        %v1873 = vmul.f32 %v1781, 0.01
        %v1874 = vmul.f32 %v1784, 0.01
        %v1875 = vmul.f32 %v1789, 0.01
        %v1876 = vmul.f32 %v1792, 0.01
        %v1877 = vmul.f32 %v1797, 0.01
        %v1878 = vmul.f32 %v1800, 0.01
        %v1879 = vmul.f32 %v1805, 0.01
        %v1880 = vmul.f32 %v1808, 0.01
        %v1881 = vmul.f32 %v1813, 0.01
        %v1882 = vmul.f32 %v1816, 0.01
        %v1883 = vsel %vm1819, %v1693, %v1851
        %v1884 = vsel %vm1820, %v1696, %v1852
        %v1885 = vsel %vm1821, %v1701, %v1853
        %v1886 = vsel %vm1822, %v1704, %v1854
        %v1887 = vsel %vm1823, %v1709, %v1855
        %v1888 = vsel %vm1824, %v1712, %v1856
        %v1889 = vsel %vm1825, %v1717, %v1857
        %v1890 = vsel %vm1826, %v1720, %v1858
        %v1891 = vsel %vm1827, %v1725, %v1859
        %v1892 = vsel %vm1828, %v1728, %v1860
        %v1893 = vsel %vm1829, %v1733, %v1861
        %v1894 = vsel %vm1830, %v1736, %v1862
        %v1895 = vsel %vm1831, %v1741, %v1863
        %v1896 = vsel %vm1832, %v1744, %v1864
        %v1897 = vsel %vm1833, %v1749, %v1865
        %v1898 = vsel %vm1834, %v1752, %v1866
        %v1899 = vsel %vm1835, %v1757, %v1867
        %v1900 = vsel %vm1836, %v1760, %v1868
        %v1901 = vsel %vm1837, %v1765, %v1869
        %v1902 = vsel %vm1838, %v1768, %v1870
        %v1903 = vsel %vm1839, %v1773, %v1871
        %v1904 = vsel %vm1840, %v1776, %v1872
        %v1905 = vsel %vm1841, %v1781, %v1873
        %v1906 = vsel %vm1842, %v1784, %v1874
        %v1907 = vsel %vm1843, %v1789, %v1875
        %v1908 = vsel %vm1844, %v1792, %v1876
        %v1909 = vsel %vm1845, %v1797, %v1877
        %v1910 = vsel %vm1846, %v1800, %v1878
        %v1911 = vsel %vm1847, %v1805, %v1879
        %v1912 = vsel %vm1848, %v1808, %v1880
        %v1913 = vsel %vm1849, %v1813, %v1881
        %v1914 = vsel %vm1850, %v1816, %v1882
        %v1915 = vpack.c.bf16 %v1884, %v1883
        %v1916 = vpack.c.bf16 %v1886, %v1885
        %v1917 = vpack.c.bf16 %v1888, %v1887
        %v1918 = vpack.c.bf16 %v1890, %v1889
        %v1919 = vpack.c.bf16 %v1892, %v1891
        %v1920 = vpack.c.bf16 %v1894, %v1893
        %v1921 = vpack.c.bf16 %v1896, %v1895
        %v1922 = vpack.c.bf16 %v1898, %v1897
        %v1923 = vpack.c.bf16 %v1900, %v1899
        %v1924 = vpack.c.bf16 %v1902, %v1901
        %v1925 = vpack.c.bf16 %v1904, %v1903
        %v1926 = vpack.c.bf16 %v1906, %v1905
        %v1927 = vpack.c.bf16 %v1908, %v1907
        %v1928 = vpack.c.bf16 %v1910, %v1909
        %v1929 = vpack.c.bf16 %v1912, %v1911
        %v1930 = vpack.c.bf16 %v1914, %v1913
        %v1932 = vshrl.u32 0, 16
        %v1934 = vrot.slane %v1932, 7
        %v1935 = vshll.u32 0, 16
        %v1937 = vor.u32 %v1934, %v1935
        %v1939 = vshrl.u32 %v1915, 16
        %v1941 = vrot.slane %v1939, 7
        %v1942 = vshll.u32 %v1915, 16
        %v1944 = vor.u32 %v1941, %v1942
        %v1946 = vshrl.u32 %v1916, 16
        %v1948 = vrot.slane %v1946, 7
        %v1949 = vshll.u32 %v1916, 16
        %v1951 = vor.u32 %v1948, %v1949
        %v1953 = vshrl.u32 %v1917, 16
        %v1955 = vrot.slane %v1953, 7
        %v1956 = vshll.u32 %v1917, 16
        %v1958 = vor.u32 %v1955, %v1956
        %v1960 = vshrl.u32 %v1918, 16
        %v1962 = vrot.slane %v1960, 7
        %v1963 = vshll.u32 %v1918, 16
        %v1965 = vor.u32 %v1962, %v1963
        %v1967 = vshrl.u32 %v1919, 16
        %v1969 = vrot.slane %v1967, 7
        %v1970 = vshll.u32 %v1919, 16
        %v1972 = vor.u32 %v1969, %v1970
        %v1974 = vshrl.u32 %v1920, 16
        %v1976 = vrot.slane %v1974, 7
        %v1977 = vshll.u32 %v1920, 16
        %v1979 = vor.u32 %v1976, %v1977
        %v1981 = vshrl.u32 %v1921, 16
        %v1983 = vrot.slane %v1981, 7
        %v1984 = vshll.u32 %v1921, 16
        %v1986 = vor.u32 %v1983, %v1984
        %v1988 = vshrl.u32 %v1922, 16
        %v1990 = vrot.slane %v1988, 7
        %v1991 = vshll.u32 %v1922, 16
        %v1993 = vor.u32 %v1990, %v1991
        %v1995 = vshrl.u32 %v1923, 16
        %v1997 = vrot.slane %v1995, 7
        %v1998 = vshll.u32 %v1923, 16
        %v2000 = vor.u32 %v1997, %v1998
        %v2002 = vshrl.u32 %v1924, 16
        %v2004 = vrot.slane %v2002, 7
        %v2005 = vshll.u32 %v1924, 16
        %v2007 = vor.u32 %v2004, %v2005
        %v2009 = vshrl.u32 %v1925, 16
        %v2011 = vrot.slane %v2009, 7
        %v2012 = vshll.u32 %v1925, 16
        %v2014 = vor.u32 %v2011, %v2012
        %v2016 = vshrl.u32 %v1926, 16
        %v2018 = vrot.slane %v2016, 7
        %v2019 = vshll.u32 %v1926, 16
        %v2021 = vor.u32 %v2018, %v2019
        %v2023 = vshrl.u32 %v1927, 16
        %v2025 = vrot.slane %v2023, 7
        %v2026 = vshll.u32 %v1927, 16
        %v2028 = vor.u32 %v2025, %v2026
        %v2030 = vshrl.u32 %v1928, 16
        %v2032 = vrot.slane %v2030, 7
        %v2033 = vshll.u32 %v1928, 16
        %v2035 = vor.u32 %v2032, %v2033
        %v2037 = vshrl.u32 %v1929, 16
        %v2039 = vrot.slane %v2037, 7
        %v2040 = vshll.u32 %v1929, 16
        %v2042 = vor.u32 %v2039, %v2040
        %v2044 = vshrl.u32 %v1930, 16
        %v2046 = vrot.slane %v2044, 7
        %v2047 = vshll.u32 %v1930, 16
        %v2049 = vor.u32 %v2046, %v2047
        %vm2084 = vcmask 1040384
        %vm2085 = vsmask.f32 256
        %vm2086 = vmand %vm2084, %vm2085
        %v2087 = vsel %vm2086, 0, %v1937
        %v2088 = vsel %vm2086, 0, %v1944
        %v2089 = vsel %vm2086, 0, %v1951
        %v2090 = vsel %vm2086, 0, %v1958
        %v2091 = vsel %vm2086, 0, %v1965
        %v2092 = vsel %vm2086, 0, %v1972
        %v2093 = vsel %vm2086, 0, %v1979
        %v2094 = vsel %vm2086, 0, %v1986
        %v2095 = vsel %vm2086, 0, %v1993
        %v2096 = vsel %vm2086, 0, %v2000
        %v2097 = vsel %vm2086, 0, %v2007
        %v2098 = vsel %vm2086, 0, %v2014
        %v2099 = vsel %vm2086, 0, %v2021
        %v2100 = vsel %vm2086, 0, %v2028
        %v2101 = vsel %vm2086, 0, %v2035
        %v2102 = vsel %vm2086, 0, %v2042
        %v2103 = vsel %vm2086, 0, %v2049
        %v2104 = vsel %vm2086, %v1934, 0
        %v2105 = vsel %vm2086, %v1941, 0
        %v2106 = vsel %vm2086, %v1948, 0
        %v2107 = vsel %vm2086, %v1955, 0
        %v2108 = vsel %vm2086, %v1962, 0
        %v2109 = vsel %vm2086, %v1969, 0
        %v2110 = vsel %vm2086, %v1976, 0
        %v2111 = vsel %vm2086, %v1983, 0
        %v2112 = vsel %vm2086, %v1990, 0
        %v2113 = vsel %vm2086, %v1997, 0
        %v2114 = vsel %vm2086, %v2004, 0
        %v2115 = vsel %vm2086, %v2011, 0
        %v2116 = vsel %vm2086, %v2018, 0
        %v2117 = vsel %vm2086, %v2025, 0
        %v2118 = vsel %vm2086, %v2032, 0
        %v2119 = vsel %vm2086, %v2039, 0
        %v2120 = vsel %vm2086, %v2046, 0
        %vm2121 = vsmask.f32 7424
        %v2123 = vshrl.u32 %v2087, 16
        %v2125 = vshll.u32 %v2087, 16
        %v2127 = vrot.slane %v2125, 1
        %v2128 = vor.u32 %v2123, %v2127
        %v2130 = vshll.u32 %v2104, 16
        %v2132 = vrot.slane %v2130, 1
        %v2133 = vsel %vm2121, %v2128, %v2132
        %v2135 = vshrl.u32 %v2088, 16
        %v2137 = vshll.u32 %v2088, 16
        %v2139 = vrot.slane %v2137, 1
        %v2140 = vor.u32 %v2135, %v2139
        %v2142 = vshll.u32 %v2105, 16
        %v2144 = vrot.slane %v2142, 1
        %v2145 = vsel %vm2121, %v2140, %v2144
        %v2147 = vshrl.u32 %v2089, 16
        %v2149 = vshll.u32 %v2089, 16
        %v2151 = vrot.slane %v2149, 1
        %v2152 = vor.u32 %v2147, %v2151
        %v2154 = vshll.u32 %v2106, 16
        %v2156 = vrot.slane %v2154, 1
        %v2157 = vsel %vm2121, %v2152, %v2156
        %v2159 = vshrl.u32 %v2090, 16
        %v2161 = vshll.u32 %v2090, 16
        %v2163 = vrot.slane %v2161, 1
        %v2164 = vor.u32 %v2159, %v2163
        %v2166 = vshll.u32 %v2107, 16
        %v2168 = vrot.slane %v2166, 1
        %v2169 = vsel %vm2121, %v2164, %v2168
        %v2171 = vshrl.u32 %v2091, 16
        %v2173 = vshll.u32 %v2091, 16
        %v2175 = vrot.slane %v2173, 1
        %v2176 = vor.u32 %v2171, %v2175
        %v2178 = vshll.u32 %v2108, 16
        %v2180 = vrot.slane %v2178, 1
        %v2181 = vsel %vm2121, %v2176, %v2180
        %v2183 = vshrl.u32 %v2092, 16
        %v2185 = vshll.u32 %v2092, 16
        %v2187 = vrot.slane %v2185, 1
        %v2188 = vor.u32 %v2183, %v2187
        %v2190 = vshll.u32 %v2109, 16
        %v2192 = vrot.slane %v2190, 1
        %v2193 = vsel %vm2121, %v2188, %v2192
        %v2195 = vshrl.u32 %v2093, 16
        %v2197 = vshll.u32 %v2093, 16
        %v2199 = vrot.slane %v2197, 1
        %v2200 = vor.u32 %v2195, %v2199
        %v2202 = vshll.u32 %v2110, 16
        %v2204 = vrot.slane %v2202, 1
        %v2205 = vsel %vm2121, %v2200, %v2204
        %v2207 = vshrl.u32 %v2094, 16
        %v2209 = vshll.u32 %v2094, 16
        %v2211 = vrot.slane %v2209, 1
        %v2212 = vor.u32 %v2207, %v2211
        %v2214 = vshll.u32 %v2111, 16
        %v2216 = vrot.slane %v2214, 1
        %v2217 = vsel %vm2121, %v2212, %v2216
        %v2219 = vshrl.u32 %v2095, 16
        %v2221 = vshll.u32 %v2095, 16
        %v2223 = vrot.slane %v2221, 1
        %v2224 = vor.u32 %v2219, %v2223
        %v2226 = vshll.u32 %v2112, 16
        %v2228 = vrot.slane %v2226, 1
        %v2229 = vsel %vm2121, %v2224, %v2228
        %v2231 = vshrl.u32 %v2096, 16
        %v2233 = vshll.u32 %v2096, 16
        %v2235 = vrot.slane %v2233, 1
        %v2236 = vor.u32 %v2231, %v2235
        %v2238 = vshll.u32 %v2113, 16
        %v2240 = vrot.slane %v2238, 1
        %v2241 = vsel %vm2121, %v2236, %v2240
        %v2243 = vshrl.u32 %v2097, 16
        %v2245 = vshll.u32 %v2097, 16
        %v2247 = vrot.slane %v2245, 1
        %v2248 = vor.u32 %v2243, %v2247
        %v2250 = vshll.u32 %v2114, 16
        %v2252 = vrot.slane %v2250, 1
        %v2253 = vsel %vm2121, %v2248, %v2252
        %v2255 = vshrl.u32 %v2098, 16
        %v2257 = vshll.u32 %v2098, 16
        %v2259 = vrot.slane %v2257, 1
        %v2260 = vor.u32 %v2255, %v2259
        %v2262 = vshll.u32 %v2115, 16
        %v2264 = vrot.slane %v2262, 1
        %v2265 = vsel %vm2121, %v2260, %v2264
        %v2267 = vshrl.u32 %v2099, 16
        %v2269 = vshll.u32 %v2099, 16
        %v2271 = vrot.slane %v2269, 1
        %v2272 = vor.u32 %v2267, %v2271
        %v2274 = vshll.u32 %v2116, 16
        %v2276 = vrot.slane %v2274, 1
        %v2277 = vsel %vm2121, %v2272, %v2276
        %v2279 = vshrl.u32 %v2100, 16
        %v2281 = vshll.u32 %v2100, 16
        %v2283 = vrot.slane %v2281, 1
        %v2284 = vor.u32 %v2279, %v2283
        %v2286 = vshll.u32 %v2117, 16
        %v2288 = vrot.slane %v2286, 1
        %v2289 = vsel %vm2121, %v2284, %v2288
        %v2291 = vshrl.u32 %v2101, 16
        %v2293 = vshll.u32 %v2101, 16
        %v2295 = vrot.slane %v2293, 1
        %v2296 = vor.u32 %v2291, %v2295
        %v2298 = vshll.u32 %v2118, 16
        %v2300 = vrot.slane %v2298, 1
        %v2301 = vsel %vm2121, %v2296, %v2300
        %v2303 = vshrl.u32 %v2102, 16
        %v2305 = vshll.u32 %v2102, 16
        %v2307 = vrot.slane %v2305, 1
        %v2308 = vor.u32 %v2303, %v2307
        %v2310 = vshll.u32 %v2119, 16
        %v2312 = vrot.slane %v2310, 1
        %v2313 = vsel %vm2121, %v2308, %v2312
        %vm2346 = vcmask 1046528
        %v2347 = vrot.slane %v2087, 1
        %v2348 = vrot.slane %v2104, 1
        %v2349 = vsel %vm2346, %v2347, %v2348
        %v2350 = vrot.slane %v2088, 1
        %v2351 = vrot.slane %v2105, 1
        %v2352 = vsel %vm2346, %v2350, %v2351
        %v2353 = vrot.slane %v2089, 1
        %v2354 = vrot.slane %v2106, 1
        %v2355 = vsel %vm2346, %v2353, %v2354
        %v2356 = vrot.slane %v2090, 1
        %v2357 = vrot.slane %v2107, 1
        %v2358 = vsel %vm2346, %v2356, %v2357
        %v2359 = vrot.slane %v2091, 1
        %v2360 = vrot.slane %v2108, 1
        %v2361 = vsel %vm2346, %v2359, %v2360
        %v2362 = vrot.slane %v2092, 1
        %v2363 = vrot.slane %v2109, 1
        %v2364 = vsel %vm2346, %v2362, %v2363
        %v2365 = vrot.slane %v2093, 1
        %v2366 = vrot.slane %v2110, 1
        %v2367 = vsel %vm2346, %v2365, %v2366
        %v2368 = vrot.slane %v2094, 1
        %v2369 = vrot.slane %v2111, 1
        %v2370 = vsel %vm2346, %v2368, %v2369
        %v2371 = vrot.slane %v2095, 1
        %v2372 = vrot.slane %v2112, 1
        %v2373 = vsel %vm2346, %v2371, %v2372
        %v2374 = vrot.slane %v2096, 1
        %v2375 = vrot.slane %v2113, 1
        %v2376 = vsel %vm2346, %v2374, %v2375
        %v2377 = vrot.slane %v2097, 1
        %v2378 = vrot.slane %v2114, 1
        %v2379 = vsel %vm2346, %v2377, %v2378
        %v2380 = vrot.slane %v2098, 1
        %v2381 = vrot.slane %v2115, 1
        %v2382 = vsel %vm2346, %v2380, %v2381
        %v2383 = vrot.slane %v2099, 1
        %v2384 = vrot.slane %v2116, 1
        %v2385 = vsel %vm2346, %v2383, %v2384
        %v2386 = vrot.slane %v2100, 1
        %v2387 = vrot.slane %v2117, 1
        %v2388 = vsel %vm2346, %v2386, %v2387
        %v2389 = vrot.slane %v2101, 1
        %v2390 = vrot.slane %v2118, 1
        %v2391 = vsel %vm2346, %v2389, %v2390
        %v2392 = vrot.slane %v2102, 1
        %v2393 = vrot.slane %v2119, 1
        %v2394 = vsel %vm2346, %v2392, %v2393
        %v2396 = vshrl.u32 %v2103, 16
        %v2398 = vshll.u32 %v2103, 16
        %v2400 = vrot.slane %v2398, 1
        %v2401 = vor.u32 %v2396, %v2400
        %v2403 = vshll.u32 %v2120, 16
        %v2405 = vrot.slane %v2403, 1
        %v2406 = vsel %vm2121, %v2401, %v2405
        %v2409 = vrot.slane %v2103, 1
        %v2410 = vrot.slane %v2120, 1
        %v2411 = vsel %vm2346, %v2409, %v2410
        %2412 = vrot.lane.b32.xlu0 %v2133, 8
        %v2413 = vpop.permute.xlu0 %2412
        %2414 = vrot.lane.b32.xlu0 %v2145, 8
        %v2415 = vpop.permute.xlu0 %2414
        %2416 = vrot.lane.b32.xlu0 %v2157, 8
        %v2417 = vpop.permute.xlu0 %2416
        %2418 = vrot.lane.b32.xlu0 %v2169, 8
        %v2419 = vpop.permute.xlu0 %2418
        %2420 = vrot.lane.b32.xlu0 %v2181, 8
        %v2421 = vpop.permute.xlu0 %2420
        %2422 = vrot.lane.b32.xlu0 %v2193, 8
        %v2423 = vpop.permute.xlu0 %2422
        %2424 = vrot.lane.b32.xlu0 %v2205, 8
        %v2425 = vpop.permute.xlu0 %2424
        %2426 = vrot.lane.b32.xlu0 %v2217, 8
        %v2427 = vpop.permute.xlu0 %2426
        %2428 = vrot.lane.b32.xlu0 %v2229, 8
        %v2429 = vpop.permute.xlu0 %2428
        %2430 = vrot.lane.b32.xlu0 %v2241, 8
        %v2431 = vpop.permute.xlu0 %2430
        %2432 = vrot.lane.b32.xlu0 %v2253, 8
        %v2433 = vpop.permute.xlu0 %2432
        %2434 = vrot.lane.b32.xlu0 %v2265, 8
        %v2435 = vpop.permute.xlu0 %2434
        %2436 = vrot.lane.b32.xlu0 %v2277, 8
        %v2437 = vpop.permute.xlu0 %2436
        %2438 = vrot.lane.b32.xlu0 %v2289, 8
        %v2439 = vpop.permute.xlu0 %2438
        %2440 = vrot.lane.b32.xlu0 %v2301, 8
        %v2441 = vpop.permute.xlu0 %2440
        %2442 = vrot.lane.b32.xlu0 %v2313, 8
        %v2443 = vpop.permute.xlu0 %2442
        %2444 = vrot.lane.b32.xlu0 %v2349, 16
        %v2445 = vpop.permute.xlu0 %2444
        %2446 = vrot.lane.b32.xlu0 %v2352, 16
        %v2447 = vpop.permute.xlu0 %2446
        %2448 = vrot.lane.b32.xlu0 %v2355, 16
        %v2449 = vpop.permute.xlu0 %2448
        %2450 = vrot.lane.b32.xlu0 %v2358, 16
        %v2451 = vpop.permute.xlu0 %2450
        %2452 = vrot.lane.b32.xlu0 %v2361, 16
        %v2453 = vpop.permute.xlu0 %2452
        %2454 = vrot.lane.b32.xlu0 %v2364, 16
        %v2455 = vpop.permute.xlu0 %2454
        %2456 = vrot.lane.b32.xlu0 %v2367, 16
        %v2457 = vpop.permute.xlu0 %2456
        %2458 = vrot.lane.b32.xlu0 %v2370, 16
        %v2459 = vpop.permute.xlu0 %2458
        %2460 = vrot.lane.b32.xlu0 %v2373, 16
        %v2461 = vpop.permute.xlu0 %2460
        %2462 = vrot.lane.b32.xlu0 %v2376, 16
        %v2463 = vpop.permute.xlu0 %2462
        %2464 = vrot.lane.b32.xlu0 %v2379, 16
        %v2465 = vpop.permute.xlu0 %2464
        %2466 = vrot.lane.b32.xlu0 %v2382, 16
        %v2467 = vpop.permute.xlu0 %2466
        %2468 = vrot.lane.b32.xlu0 %v2385, 16
        %v2469 = vpop.permute.xlu0 %2468
        %2470 = vrot.lane.b32.xlu0 %v2388, 16
        %v2471 = vpop.permute.xlu0 %2470
        %2472 = vrot.lane.b32.xlu0 %v2391, 16
        %v2473 = vpop.permute.xlu0 %2472
        %2474 = vrot.lane.b32.xlu0 %v2394, 16
        %v2475 = vpop.permute.xlu0 %2474
        %2476 = vrot.lane.b32.xlu0 %v2088, 24
        %v2477 = vpop.permute.xlu0 %2476
        %2478 = vrot.lane.b32.xlu0 %v2089, 24
        %v2479 = vpop.permute.xlu0 %2478
        %2480 = vrot.lane.b32.xlu0 %v2090, 24
        %v2481 = vpop.permute.xlu0 %2480
        %2482 = vrot.lane.b32.xlu0 %v2091, 24
        %v2483 = vpop.permute.xlu0 %2482
        %2484 = vrot.lane.b32.xlu0 %v2092, 24
        %v2485 = vpop.permute.xlu0 %2484
        %2486 = vrot.lane.b32.xlu0 %v2093, 24
        %v2487 = vpop.permute.xlu0 %2486
        %2488 = vrot.lane.b32.xlu0 %v2094, 24
        %v2489 = vpop.permute.xlu0 %2488
        %2490 = vrot.lane.b32.xlu0 %v2095, 24
        %v2491 = vpop.permute.xlu0 %2490
        %2492 = vrot.lane.b32.xlu0 %v2096, 24
        %v2493 = vpop.permute.xlu0 %2492
        %2494 = vrot.lane.b32.xlu0 %v2097, 24
        %v2495 = vpop.permute.xlu0 %2494
        %2496 = vrot.lane.b32.xlu0 %v2098, 24
        %v2497 = vpop.permute.xlu0 %2496
        %2498 = vrot.lane.b32.xlu0 %v2099, 24
        %v2499 = vpop.permute.xlu0 %2498
        %2500 = vrot.lane.b32.xlu0 %v2100, 24
        %v2501 = vpop.permute.xlu0 %2500
        %2502 = vrot.lane.b32.xlu0 %v2101, 24
        %v2503 = vpop.permute.xlu0 %2502
        %2504 = vrot.lane.b32.xlu0 %v2102, 24
        %v2505 = vpop.permute.xlu0 %2504
        %2506 = vrot.lane.b32.xlu0 %v2103, 24
        %v2507 = vpop.permute.xlu0 %2506
        %2508 = vrot.lane.b32.xlu0 %v2145, 32
        %v2509 = vpop.permute.xlu0 %2508
        %2510 = vrot.lane.b32.xlu0 %v2157, 32
        %v2511 = vpop.permute.xlu0 %2510
        %2512 = vrot.lane.b32.xlu0 %v2169, 32
        %v2513 = vpop.permute.xlu0 %2512
        %2514 = vrot.lane.b32.xlu0 %v2181, 32
        %v2515 = vpop.permute.xlu0 %2514
        %2516 = vrot.lane.b32.xlu0 %v2193, 32
        %v2517 = vpop.permute.xlu0 %2516
        %2518 = vrot.lane.b32.xlu0 %v2205, 32
        %v2519 = vpop.permute.xlu0 %2518
        %2520 = vrot.lane.b32.xlu0 %v2217, 32
        %v2521 = vpop.permute.xlu0 %2520
        %2522 = vrot.lane.b32.xlu0 %v2229, 32
        %v2523 = vpop.permute.xlu0 %2522
        %2524 = vrot.lane.b32.xlu0 %v2241, 32
        %v2525 = vpop.permute.xlu0 %2524
        %2526 = vrot.lane.b32.xlu0 %v2253, 32
        %v2527 = vpop.permute.xlu0 %2526
        %2528 = vrot.lane.b32.xlu0 %v2265, 32
        %v2529 = vpop.permute.xlu0 %2528
        %2530 = vrot.lane.b32.xlu0 %v2277, 32
        %v2531 = vpop.permute.xlu0 %2530
        %2532 = vrot.lane.b32.xlu0 %v2289, 32
        %v2533 = vpop.permute.xlu0 %2532
        %2534 = vrot.lane.b32.xlu0 %v2301, 32
        %v2535 = vpop.permute.xlu0 %2534
        %2536 = vrot.lane.b32.xlu0 %v2313, 32
        %v2537 = vpop.permute.xlu0 %2536
        %2538 = vrot.lane.b32.xlu0 %v2406, 32
        %v2539 = vpop.permute.xlu0 %2538
        %2540 = vrot.lane.b32.xlu0 %v2352, 40
        %v2541 = vpop.permute.xlu0 %2540
        %2542 = vrot.lane.b32.xlu0 %v2355, 40
        %v2543 = vpop.permute.xlu0 %2542
        %2544 = vrot.lane.b32.xlu0 %v2358, 40
        %v2545 = vpop.permute.xlu0 %2544
        %2546 = vrot.lane.b32.xlu0 %v2361, 40
        %v2547 = vpop.permute.xlu0 %2546
        %2548 = vrot.lane.b32.xlu0 %v2364, 40
        %v2549 = vpop.permute.xlu0 %2548
        %2550 = vrot.lane.b32.xlu0 %v2367, 40
        %v2551 = vpop.permute.xlu0 %2550
        %2552 = vrot.lane.b32.xlu0 %v2370, 40
        %v2553 = vpop.permute.xlu0 %2552
        %2554 = vrot.lane.b32.xlu0 %v2373, 40
        %v2555 = vpop.permute.xlu0 %2554
        %2556 = vrot.lane.b32.xlu0 %v2376, 40
        %v2557 = vpop.permute.xlu0 %2556
        %2558 = vrot.lane.b32.xlu0 %v2379, 40
        %v2559 = vpop.permute.xlu0 %2558
        %2560 = vrot.lane.b32.xlu0 %v2382, 40
        %v2561 = vpop.permute.xlu0 %2560
        %2562 = vrot.lane.b32.xlu0 %v2385, 40
        %v2563 = vpop.permute.xlu0 %2562
        %2564 = vrot.lane.b32.xlu0 %v2388, 40
        %v2565 = vpop.permute.xlu0 %2564
        %2566 = vrot.lane.b32.xlu0 %v2391, 40
        %v2567 = vpop.permute.xlu0 %2566
        %2568 = vrot.lane.b32.xlu0 %v2394, 40
        %v2569 = vpop.permute.xlu0 %2568
        %2570 = vrot.lane.b32.xlu0 %v2411, 40
        %v2571 = vpop.permute.xlu0 %2570
        %2572 = vrot.lane.b32.xlu0 %v2089, 48
        %v2573 = vpop.permute.xlu0 %2572
        %2574 = vrot.lane.b32.xlu0 %v2090, 48
        %v2575 = vpop.permute.xlu0 %2574
        %2576 = vrot.lane.b32.xlu0 %v2091, 48
        %v2577 = vpop.permute.xlu0 %2576
        %2578 = vrot.lane.b32.xlu0 %v2092, 48
        %v2579 = vpop.permute.xlu0 %2578
        %2580 = vrot.lane.b32.xlu0 %v2093, 48
        %v2581 = vpop.permute.xlu0 %2580
        %2582 = vrot.lane.b32.xlu0 %v2094, 48
        %v2583 = vpop.permute.xlu0 %2582
        %2584 = vrot.lane.b32.xlu0 %v2095, 48
        %v2585 = vpop.permute.xlu0 %2584
        %2586 = vrot.lane.b32.xlu0 %v2096, 48
        %v2587 = vpop.permute.xlu0 %2586
        %2588 = vrot.lane.b32.xlu0 %v2097, 48
        %v2589 = vpop.permute.xlu0 %2588
        %2590 = vrot.lane.b32.xlu0 %v2098, 48
        %v2591 = vpop.permute.xlu0 %2590
        %2592 = vrot.lane.b32.xlu0 %v2099, 48
        %v2593 = vpop.permute.xlu0 %2592
        %2594 = vrot.lane.b32.xlu0 %v2100, 48
        %v2595 = vpop.permute.xlu0 %2594
        %2596 = vrot.lane.b32.xlu0 %v2101, 48
        %v2597 = vpop.permute.xlu0 %2596
        %2598 = vrot.lane.b32.xlu0 %v2102, 48
        %v2599 = vpop.permute.xlu0 %2598
        %2600 = vrot.lane.b32.xlu0 %v2103, 48
        %v2601 = vpop.permute.xlu0 %2600
        %2602 = vrot.lane.b32.xlu0 %v2087, 48
        %v2603 = vpop.permute.xlu0 %2602
        %2604 = vrot.lane.b32.xlu0 %v2157, 56
        %v2605 = vpop.permute.xlu0 %2604
        %2606 = vrot.lane.b32.xlu0 %v2169, 56
        %v2607 = vpop.permute.xlu0 %2606
        %2608 = vrot.lane.b32.xlu0 %v2181, 56
        %v2609 = vpop.permute.xlu0 %2608
        %2610 = vrot.lane.b32.xlu0 %v2193, 56
        %v2611 = vpop.permute.xlu0 %2610
        %2612 = vrot.lane.b32.xlu0 %v2205, 56
        %v2613 = vpop.permute.xlu0 %2612
        %2614 = vrot.lane.b32.xlu0 %v2217, 56
        %v2615 = vpop.permute.xlu0 %2614
        %2616 = vrot.lane.b32.xlu0 %v2229, 56
        %v2617 = vpop.permute.xlu0 %2616
        %2618 = vrot.lane.b32.xlu0 %v2241, 56
        %v2619 = vpop.permute.xlu0 %2618
        %2620 = vrot.lane.b32.xlu0 %v2253, 56
        %v2621 = vpop.permute.xlu0 %2620
        %2622 = vrot.lane.b32.xlu0 %v2265, 56
        %v2623 = vpop.permute.xlu0 %2622
        %2624 = vrot.lane.b32.xlu0 %v2277, 56
        %v2625 = vpop.permute.xlu0 %2624
        %2626 = vrot.lane.b32.xlu0 %v2289, 56
        %v2627 = vpop.permute.xlu0 %2626
        %2628 = vrot.lane.b32.xlu0 %v2301, 56
        %v2629 = vpop.permute.xlu0 %2628
        %2630 = vrot.lane.b32.xlu0 %v2313, 56
        %v2631 = vpop.permute.xlu0 %2630
        %2632 = vrot.lane.b32.xlu0 %v2406, 56
        %v2633 = vpop.permute.xlu0 %2632
        %2634 = vrot.lane.b32.xlu0 %v2133, 56
        %v2635 = vpop.permute.xlu0 %2634
        %2636 = vrot.lane.b32.xlu0 %v2355, 64
        %v2637 = vpop.permute.xlu0 %2636
        %2638 = vrot.lane.b32.xlu0 %v2358, 64
        %v2639 = vpop.permute.xlu0 %2638
        %2640 = vrot.lane.b32.xlu0 %v2361, 64
        %v2641 = vpop.permute.xlu0 %2640
        %2642 = vrot.lane.b32.xlu0 %v2364, 64
        %v2643 = vpop.permute.xlu0 %2642
        %2644 = vrot.lane.b32.xlu0 %v2367, 64
        %v2645 = vpop.permute.xlu0 %2644
        %2646 = vrot.lane.b32.xlu0 %v2370, 64
        %v2647 = vpop.permute.xlu0 %2646
        %2648 = vrot.lane.b32.xlu0 %v2373, 64
        %v2649 = vpop.permute.xlu0 %2648
        %2650 = vrot.lane.b32.xlu0 %v2376, 64
        %v2651 = vpop.permute.xlu0 %2650
        %2652 = vrot.lane.b32.xlu0 %v2379, 64
        %v2653 = vpop.permute.xlu0 %2652
        %2654 = vrot.lane.b32.xlu0 %v2382, 64
        %v2655 = vpop.permute.xlu0 %2654
        %2656 = vrot.lane.b32.xlu0 %v2385, 64
        %v2657 = vpop.permute.xlu0 %2656
        %2658 = vrot.lane.b32.xlu0 %v2388, 64
        %v2659 = vpop.permute.xlu0 %2658
        %2660 = vrot.lane.b32.xlu0 %v2391, 64
        %v2661 = vpop.permute.xlu0 %2660
        %2662 = vrot.lane.b32.xlu0 %v2394, 64
        %v2663 = vpop.permute.xlu0 %2662
        %2664 = vrot.lane.b32.xlu0 %v2411, 64
        %v2665 = vpop.permute.xlu0 %2664
        %2666 = vrot.lane.b32.xlu0 %v2349, 64
        %v2667 = vpop.permute.xlu0 %2666
        %2668 = vrot.lane.b32.xlu0 %v977, 72
        %v2669 = vpop.permute.xlu0 %2668
        %2670 = vrot.lane.b32.xlu0 %v978, 72
        %v2671 = vpop.permute.xlu0 %2670
        %2672 = vrot.lane.b32.xlu0 %v979, 72
        %v2673 = vpop.permute.xlu0 %2672
        %2674 = vrot.lane.b32.xlu0 %v980, 72
        %v2675 = vpop.permute.xlu0 %2674
        %2676 = vrot.lane.b32.xlu0 %v981, 72
        %v2677 = vpop.permute.xlu0 %2676
        %2678 = vrot.lane.b32.xlu0 %v982, 72
        %v2679 = vpop.permute.xlu0 %2678
        %2680 = vrot.lane.b32.xlu0 %v983, 72
        %v2681 = vpop.permute.xlu0 %2680
        %2682 = vrot.lane.b32.xlu0 %v984, 72
        %v2683 = vpop.permute.xlu0 %2682
        %2684 = vrot.lane.b32.xlu0 %v985, 72
        %v2685 = vpop.permute.xlu0 %2684
        %2686 = vrot.lane.b32.xlu0 %v986, 72
        %v2687 = vpop.permute.xlu0 %2686
        %2688 = vrot.lane.b32.xlu0 %v987, 72
        %v2689 = vpop.permute.xlu0 %2688
        %2690 = vrot.lane.b32.xlu0 %v988, 72
        %v2691 = vpop.permute.xlu0 %2690
        %2692 = vrot.lane.b32.xlu0 %v989, 72
        %v2693 = vpop.permute.xlu0 %2692
        %2694 = vrot.lane.b32.xlu0 %v990, 72
        %v2695 = vpop.permute.xlu0 %2694
        %2696 = vrot.lane.b32.xlu0 %v991, 72
        %v2697 = vpop.permute.xlu0 %2696
        %2698 = vrot.lane.b32.xlu0 %v1141, 72
        %v2699 = vpop.permute.xlu0 %2698
        %v2701 = vsel %vm1363, %v2087, %v2413
        %v2703 = vsel %vm1363, %v2088, %v2415
        %v2705 = vsel %vm1363, %v2089, %v2417
        %v2707 = vsel %vm1363, %v2090, %v2419
        %v2709 = vsel %vm1363, %v2091, %v2421
        %v2711 = vsel %vm1363, %v2092, %v2423
        %v2713 = vsel %vm1363, %v2093, %v2425
        %v2715 = vsel %vm1363, %v2094, %v2427
        %v2717 = vsel %vm1363, %v2095, %v2429
        %v2719 = vsel %vm1363, %v2096, %v2431
        %v2721 = vsel %vm1363, %v2097, %v2433
        %v2723 = vsel %vm1363, %v2098, %v2435
        %v2725 = vsel %vm1363, %v2099, %v2437
        %v2727 = vsel %vm1363, %v2100, %v2439
        %v2729 = vsel %vm1363, %v2101, %v2441
        %v2731 = vsel %vm1363, %v2102, %v2443
        %v2733 = vsel %vm1429, %v2701, %v2445
        %v2735 = vsel %vm1429, %v2703, %v2447
        %v2737 = vsel %vm1429, %v2705, %v2449
        %v2739 = vsel %vm1429, %v2707, %v2451
        %v2741 = vsel %vm1429, %v2709, %v2453
        %v2743 = vsel %vm1429, %v2711, %v2455
        %v2745 = vsel %vm1429, %v2713, %v2457
        %v2747 = vsel %vm1429, %v2715, %v2459
        %v2749 = vsel %vm1429, %v2717, %v2461
        %v2751 = vsel %vm1429, %v2719, %v2463
        %v2753 = vsel %vm1429, %v2721, %v2465
        %v2755 = vsel %vm1429, %v2723, %v2467
        %v2757 = vsel %vm1429, %v2725, %v2469
        %v2759 = vsel %vm1429, %v2727, %v2471
        %v2761 = vsel %vm1429, %v2729, %v2473
        %v2763 = vsel %vm1429, %v2731, %v2475
        %v2765 = vsel %vm1495, %v2733, %v2477
        %v2767 = vsel %vm1495, %v2735, %v2479
        %v2769 = vsel %vm1495, %v2737, %v2481
        %v2771 = vsel %vm1495, %v2739, %v2483
        %v2773 = vsel %vm1495, %v2741, %v2485
        %v2775 = vsel %vm1495, %v2743, %v2487
        %v2777 = vsel %vm1495, %v2745, %v2489
        %v2779 = vsel %vm1495, %v2747, %v2491
        %v2781 = vsel %vm1495, %v2749, %v2493
        %v2783 = vsel %vm1495, %v2751, %v2495
        %v2785 = vsel %vm1495, %v2753, %v2497
        %v2787 = vsel %vm1495, %v2755, %v2499
        %v2789 = vsel %vm1495, %v2757, %v2501
        %v2791 = vsel %vm1495, %v2759, %v2503
        %v2793 = vsel %vm1495, %v2761, %v2505
        %v2795 = vsel %vm1495, %v2763, %v2507
        %v2797 = vsel %vm1561, %v2765, %v2509
        %v2799 = vsel %vm1561, %v2767, %v2511
        %v2801 = vsel %vm1561, %v2769, %v2513
        %v2803 = vsel %vm1561, %v2771, %v2515
        %v2805 = vsel %vm1561, %v2773, %v2517
        %v2807 = vsel %vm1561, %v2775, %v2519
        %v2809 = vsel %vm1561, %v2777, %v2521
        %v2811 = vsel %vm1561, %v2779, %v2523
        %v2813 = vsel %vm1561, %v2781, %v2525
        %v2815 = vsel %vm1561, %v2783, %v2527
        %v2817 = vsel %vm1561, %v2785, %v2529
        %v2819 = vsel %vm1561, %v2787, %v2531
        %v2821 = vsel %vm1561, %v2789, %v2533
        %v2823 = vsel %vm1561, %v2791, %v2535
        %v2825 = vsel %vm1561, %v2793, %v2537
        %v2827 = vsel %vm1561, %v2795, %v2539
        %vm2828 = vcmask 326656
        %v2830 = vsel %vm2828, %v2797, %v2541
        %v2832 = vsel %vm2828, %v2799, %v2543
        %v2834 = vsel %vm2828, %v2801, %v2545
        %v2836 = vsel %vm2828, %v2803, %v2547
        %v2838 = vsel %vm2828, %v2805, %v2549
        %v2840 = vsel %vm2828, %v2807, %v2551
        %v2842 = vsel %vm2828, %v2809, %v2553
        %v2844 = vsel %vm2828, %v2811, %v2555
        %v2846 = vsel %vm2828, %v2813, %v2557
        %v2848 = vsel %vm2828, %v2815, %v2559
        %v2850 = vsel %vm2828, %v2817, %v2561
        %v2852 = vsel %vm2828, %v2819, %v2563
        %v2854 = vsel %vm2828, %v2821, %v2565
        %v2856 = vsel %vm2828, %v2823, %v2567
        %v2858 = vsel %vm2828, %v2825, %v2569
        %v2860 = vsel %vm2828, %v2827, %v2571
        %vm2861 = vcmask 392192
        %v2863 = vsel %vm2861, %v2830, %v2573
        %v2865 = vsel %vm2861, %v2832, %v2575
        %v2867 = vsel %vm2861, %v2834, %v2577
        %v2869 = vsel %vm2861, %v2836, %v2579
        %v2871 = vsel %vm2861, %v2838, %v2581
        %v2873 = vsel %vm2861, %v2840, %v2583
        %v2875 = vsel %vm2861, %v2842, %v2585
        %v2877 = vsel %vm2861, %v2844, %v2587
        %v2879 = vsel %vm2861, %v2846, %v2589
        %v2881 = vsel %vm2861, %v2848, %v2591
        %v2883 = vsel %vm2861, %v2850, %v2593
        %v2885 = vsel %vm2861, %v2852, %v2595
        %v2887 = vsel %vm2861, %v2854, %v2597
        %v2889 = vsel %vm2861, %v2856, %v2599
        %v2891 = vsel %vm2861, %v2858, %v2601
        %v2893 = vsel %vm2861, %v2860, %v2603
        %vm2894 = vcmask 457728
        %v2896 = vsel %vm2894, %v2863, %v2605
        %v2898 = vsel %vm2894, %v2865, %v2607
        %v2900 = vsel %vm2894, %v2867, %v2609
        %v2902 = vsel %vm2894, %v2869, %v2611
        %v2904 = vsel %vm2894, %v2871, %v2613
        %v2906 = vsel %vm2894, %v2873, %v2615
        %v2908 = vsel %vm2894, %v2875, %v2617
        %v2910 = vsel %vm2894, %v2877, %v2619
        %v2912 = vsel %vm2894, %v2879, %v2621
        %v2914 = vsel %vm2894, %v2881, %v2623
        %v2916 = vsel %vm2894, %v2883, %v2625
        %v2918 = vsel %vm2894, %v2885, %v2627
        %v2920 = vsel %vm2894, %v2887, %v2629
        %v2922 = vsel %vm2894, %v2889, %v2631
        %v2924 = vsel %vm2894, %v2891, %v2633
        %v2926 = vsel %vm2894, %v2893, %v2635
        %vm2927 = vcmask 523264
        %v2929 = vsel %vm2927, %v2896, %v2637
        %v2931 = vsel %vm2927, %v2898, %v2639
        %v2933 = vsel %vm2927, %v2900, %v2641
        %v2935 = vsel %vm2927, %v2902, %v2643
        %v2937 = vsel %vm2927, %v2904, %v2645
        %v2939 = vsel %vm2927, %v2906, %v2647
        %v2941 = vsel %vm2927, %v2908, %v2649
        %v2943 = vsel %vm2927, %v2910, %v2651
        %v2945 = vsel %vm2927, %v2912, %v2653
        %v2947 = vsel %vm2927, %v2914, %v2655
        %v2949 = vsel %vm2927, %v2916, %v2657
        %v2951 = vsel %vm2927, %v2918, %v2659
        %v2953 = vsel %vm2927, %v2920, %v2661
        %v2955 = vsel %vm2927, %v2922, %v2663
        %v2957 = vsel %vm2927, %v2924, %v2665
        %v2959 = vsel %vm2927, %v2926, %v2667
        %vm2960 = vcmask 588800
        %v2962 = vsel %vm2960, %v2929, %v2669
        %v2964 = vsel %vm2960, %v2931, %v2671
        %v2966 = vsel %vm2960, %v2933, %v2673
        %v2968 = vsel %vm2960, %v2935, %v2675
        %v2970 = vsel %vm2960, %v2937, %v2677
        %v2972 = vsel %vm2960, %v2939, %v2679
        %v2974 = vsel %vm2960, %v2941, %v2681
        %v2976 = vsel %vm2960, %v2943, %v2683
        %v2978 = vsel %vm2960, %v2945, %v2685
        %v2980 = vsel %vm2960, %v2947, %v2687
        %v2982 = vsel %vm2960, %v2949, %v2689
        %v2984 = vsel %vm2960, %v2951, %v2691
        %v2986 = vsel %vm2960, %v2953, %v2693
        %v2988 = vsel %vm2960, %v2955, %v2695
        %v2990 = vsel %vm2960, %v2957, %v2697
        %v2992 = vsel %vm2960, %v2959, %v2699
        %v2993 = vld [vmem:[%s3] sm:$0xf]
        %v2994 = vld [vmem:[%s3 + $0x4] sm:$0xf]
        %v2995 = vld [vmem:[%s3 + $0x8] sm:$0xf]
        %v2996 = vld [vmem:[%s3 + $0xc] sm:$0xf]
        %v2997 = vld [vmem:[%s3 + $0x10] sm:$0xf]
        %v2998 = vld [vmem:[%s3 + $0x14] sm:$0xf]
        %v2999 = vld [vmem:[%s3 + $0x18] sm:$0xf]
        %v3000 = vld [vmem:[%s3 + $0x1c] sm:$0xf]
        %v3001 = vld [vmem:[%s3 + $0x20] sm:$0xf]
        %v3002 = vld [vmem:[%s3 + $0x24] sm:$0x3]
        %v3003 = vld [vmem:[%s4] sm:$0x1]
        %v3005 = vlaneseq
        %v3006 = vshrl.u32 %v3005, 7
        %v3007 = vsub.s32 0, %v3006
        %v3008 = vrot.slane %v3003, %v3007
        %v3020 = vunpack.c.l.b16 %v2993
        %v3021 = vunpack.c.l.b16 %v2994
        %v3022 = vunpack.c.l.b16 %v2995
        %v3023 = vunpack.c.l.b16 %v2996
        %v3024 = vunpack.c.l.b16 %v2997
        %v3025 = vunpack.c.l.b16 %v2998
        %v3026 = vunpack.c.l.b16 %v2999
        %v3027 = vunpack.c.l.b16 %v3000
        %v3028 = vunpack.c.l.b16 %v3001
        %v3029 = vunpack.c.l.b16 %v3002
        %v3030 = vpack.c.b16 %v3021, %v3020
        %v3031 = vpack.c.b16 %v3023, %v3022
        %v3032 = vpack.c.b16 %v3025, %v3024
        %v3033 = vpack.c.b16 %v3027, %v3026
        %v3034 = vpack.c.b16 %v3029, %v3028
        %vm3039 = vcmask 621568
        %v3040 = vsel %vm3039, %v2962, 0
        %v3042 = vsel %vm3039, %v2964, 0
        %v3044 = vsel %vm3039, %v2966, 0
        %v3046 = vsel %vm3039, %v2968, 0
        %v3048 = vsel %vm3039, %v2970, 0
        %v3050 = vsel %vm3039, %v2972, 0
        %v3052 = vsel %vm3039, %v2974, 0
        %v3054 = vsel %vm3039, %v2976, 0
        %v3056 = vsel %vm3039, %v2978, 0
        %v3058 = vsel %vm3039, %v2980, 0
        %v3060 = vsel %vm3039, %v2982, 0
        %v3062 = vsel %vm3039, %v2984, 0
        %v3064 = vsel %vm3039, %v2986, 0
        %v3066 = vsel %vm3039, %v2988, 0
        %v3068 = vsel %vm3039, %v2990, 0
        %v3070 = vsel %vm3039, %v2992, 0
        %vm3072 = vcmask 1045504
        %v3074 = vsel %vm3072, %v3034, 0
        %3076 = vmatprep.subr.bf16.mxu0 0
        %3077 = vmatpush1.bf16.msra.mxu0 %v3030
        %3078 = vmatprep.subr.bf16.mxu0 0
        %3079 = vmatpush1.bf16.msra.mxu0 %v3031
        %3080 = vmatprep.subr.bf16.mxu0 0
        %3081 = vmatpush1.bf16.msra.mxu0 %v3032
        %3082 = vmatprep.subr.bf16.mxu0 0
        %3083 = vmatpush1.bf16.msra.mxu0 %v3033
        %3084 = vmatprep.subr.bf16.mxu0 0
        %3085 = vmatpush1.bf16.msra.mxu0 %v3074
        %3086 = vmatprep.subr.bf16.mxu0 0
        %3087 = vmatpush1.bf16.msra.mxu0 0
        %3088 = vmatprep.subr.bf16.mxu0 0
        %3089 = vmatpush1.bf16.msra.mxu0 0
        %3090 = vmatprep.subr.bf16.mxu0 0
        %3091 = vmatpush1.bf16.msra.mxu0 0
        %3092 = vmatprep.subr.bf16.mxu0 0
        %3093 = vmatpush1.bf16.msra.mxu0 0
        %3094 = vmatprep.subr.bf16.mxu0 0
        %3095 = vmatpush1.bf16.msra.mxu0 0
        %3096 = vmatprep.subr.bf16.mxu0 0
        %3097 = vmatpush1.bf16.msra.mxu0 0
        %3098 = vmatprep.subr.bf16.mxu0 0
        %3099 = vmatpush1.bf16.msra.mxu0 0
        %3100 = vmatprep.subr.bf16.mxu0 0
        %3101 = vmatpush1.bf16.msra.mxu0 0
        %3102 = vmatprep.subr.bf16.mxu0 0
        %3103 = vmatpush1.bf16.msra.mxu0 0
        %3104 = vmatprep.subr.bf16.mxu0 0
        %3105 = vmatpush1.bf16.msra.mxu0 0
        %3106 = vmatprep.subr.bf16.mxu0 0
        %3107 = vmatpush1.bf16.msra.mxu0 0
        %3108 = vmatprep.mubr.bf16.mxu0 0
        %3109 = vmatmul.mubr.bf16.gmra.mrb[0].mxu0 %v3040
        %v3110 = vpop.f32.mrb[0].mxu0
        %v3111 = vadd.f32 %v3008, %v3110
        %v3112 = vpop.f32.mrb[0].mxu0
        %v3113 = vpop.f32.mrb[0].mxu0
        %v3114 = vadd.f32 %v3008, %v3113
        %v3115 = vpop.f32.mrb[0].mxu0
        %3116 = vmatprep.mubr.bf16.mxu0 0
        %3117 = vmatmul.mubr.bf16.gmra.mrb[0].mxu0 %v3042
        %v3118 = vpop.f32.mrb[0].mxu0
        %v3119 = vadd.f32 %v3008, %v3118
        %v3120 = vpop.f32.mrb[0].mxu0
        %v3121 = vpop.f32.mrb[0].mxu0
        %v3122 = vadd.f32 %v3008, %v3121
        %v3123 = vpop.f32.mrb[0].mxu0
        %3124 = vmatprep.mubr.bf16.mxu0 0
        %3125 = vmatmul.mubr.bf16.gmra.mrb[0].mxu0 %v3044
        %v3126 = vpop.f32.mrb[0].mxu0
        %v3127 = vadd.f32 %v3008, %v3126
        %v3128 = vpop.f32.mrb[0].mxu0
        %v3129 = vpop.f32.mrb[0].mxu0
        %v3130 = vadd.f32 %v3008, %v3129
        %v3131 = vpop.f32.mrb[0].mxu0
        %3132 = vmatprep.mubr.bf16.mxu0 0
        %3133 = vmatmul.mubr.bf16.gmra.mrb[0].mxu0 %v3046
        %v3134 = vpop.f32.mrb[0].mxu0
        %v3135 = vadd.f32 %v3008, %v3134
        %v3136 = vpop.f32.mrb[0].mxu0
        %v3137 = vpop.f32.mrb[0].mxu0
        %v3138 = vadd.f32 %v3008, %v3137
        %v3139 = vpop.f32.mrb[0].mxu0
        %3140 = vmatprep.mubr.bf16.mxu0 0
        %3141 = vmatmul.mubr.bf16.gmra.mrb[0].mxu0 %v3048
        %v3142 = vpop.f32.mrb[0].mxu0
        %v3143 = vadd.f32 %v3008, %v3142
        %v3144 = vpop.f32.mrb[0].mxu0
        %v3145 = vpop.f32.mrb[0].mxu0
        %v3146 = vadd.f32 %v3008, %v3145
        %v3147 = vpop.f32.mrb[0].mxu0
        %3148 = vmatprep.mubr.bf16.mxu0 0
        %3149 = vmatmul.mubr.bf16.gmra.mrb[0].mxu0 %v3050
        %v3150 = vpop.f32.mrb[0].mxu0
        %v3151 = vadd.f32 %v3008, %v3150
        %v3152 = vpop.f32.mrb[0].mxu0
        %v3153 = vpop.f32.mrb[0].mxu0
        %v3154 = vadd.f32 %v3008, %v3153
        %v3155 = vpop.f32.mrb[0].mxu0
        %3156 = vmatprep.mubr.bf16.mxu0 0
        %3157 = vmatmul.mubr.bf16.gmra.mrb[0].mxu0 %v3052
        %v3158 = vpop.f32.mrb[0].mxu0
        %v3159 = vadd.f32 %v3008, %v3158
        %v3160 = vpop.f32.mrb[0].mxu0
        %v3161 = vpop.f32.mrb[0].mxu0
        %v3162 = vadd.f32 %v3008, %v3161
        %v3163 = vpop.f32.mrb[0].mxu0
        %3164 = vmatprep.mubr.bf16.mxu0 0
        %3165 = vmatmul.mubr.bf16.gmra.mrb[0].mxu0 %v3054
        %v3166 = vpop.f32.mrb[0].mxu0
        %v3167 = vadd.f32 %v3008, %v3166
        %v3168 = vpop.f32.mrb[0].mxu0
        %v3169 = vpop.f32.mrb[0].mxu0
        %v3170 = vadd.f32 %v3008, %v3169
        %v3171 = vpop.f32.mrb[0].mxu0
        %3172 = vmatprep.mubr.bf16.mxu0 0
        %3173 = vmatmul.mubr.bf16.gmra.mrb[0].mxu0 %v3056
        %v3174 = vpop.f32.mrb[0].mxu0
        %v3175 = vadd.f32 %v3008, %v3174
        %v3176 = vpop.f32.mrb[0].mxu0
        %v3177 = vpop.f32.mrb[0].mxu0
        %v3178 = vadd.f32 %v3008, %v3177
        %v3179 = vpop.f32.mrb[0].mxu0
        %3180 = vmatprep.mubr.bf16.mxu0 0
        %3181 = vmatmul.mubr.bf16.gmra.mrb[0].mxu0 %v3058
        %v3182 = vpop.f32.mrb[0].mxu0
        %v3183 = vadd.f32 %v3008, %v3182
        %v3184 = vpop.f32.mrb[0].mxu0
        %v3185 = vpop.f32.mrb[0].mxu0
        %v3186 = vadd.f32 %v3008, %v3185
        %v3187 = vpop.f32.mrb[0].mxu0
        %3188 = vmatprep.mubr.bf16.mxu0 0
        %3189 = vmatmul.mubr.bf16.gmra.mrb[0].mxu0 %v3060
        %v3190 = vpop.f32.mrb[0].mxu0
        %v3191 = vadd.f32 %v3008, %v3190
        %v3192 = vpop.f32.mrb[0].mxu0
        %v3193 = vpop.f32.mrb[0].mxu0
        %v3194 = vadd.f32 %v3008, %v3193
        %v3195 = vpop.f32.mrb[0].mxu0
        %3196 = vmatprep.mubr.bf16.mxu0 0
        %3197 = vmatmul.mubr.bf16.gmra.mrb[0].mxu0 %v3062
        %v3198 = vpop.f32.mrb[0].mxu0
        %v3199 = vadd.f32 %v3008, %v3198
        %v3200 = vpop.f32.mrb[0].mxu0
        %v3201 = vpop.f32.mrb[0].mxu0
        %v3202 = vadd.f32 %v3008, %v3201
        %v3203 = vpop.f32.mrb[0].mxu0
        %3204 = vmatprep.mubr.bf16.mxu0 0
        %3205 = vmatmul.mubr.bf16.gmra.mrb[0].mxu0 %v3064
        %v3206 = vpop.f32.mrb[0].mxu0
        %v3207 = vadd.f32 %v3008, %v3206
        %v3208 = vpop.f32.mrb[0].mxu0
        %v3209 = vpop.f32.mrb[0].mxu0
        %v3210 = vadd.f32 %v3008, %v3209
        %v3211 = vpop.f32.mrb[0].mxu0
        %3212 = vmatprep.mubr.bf16.mxu0 0
        %3213 = vmatmul.mubr.bf16.gmra.mrb[0].mxu0 %v3066
        %v3214 = vpop.f32.mrb[0].mxu0
        %v3215 = vadd.f32 %v3008, %v3214
        %v3216 = vpop.f32.mrb[0].mxu0
        %v3217 = vpop.f32.mrb[0].mxu0
        %v3218 = vadd.f32 %v3008, %v3217
        %v3219 = vpop.f32.mrb[0].mxu0
        %3220 = vmatprep.mubr.bf16.mxu0 0
        %3221 = vmatmul.mubr.bf16.gmra.mrb[0].mxu0 %v3068
        %v3222 = vpop.f32.mrb[0].mxu0
        %v3223 = vadd.f32 %v3008, %v3222
        %v3224 = vpop.f32.mrb[0].mxu0
        %v3225 = vpop.f32.mrb[0].mxu0
        %v3226 = vadd.f32 %v3008, %v3225
        %v3227 = vpop.f32.mrb[0].mxu0
        %3228 = vmatprep.mubr.bf16.mxu0 0
        %3229 = vmatmul.mubr.bf16.gmra.mrb[0].mxu0 %v3070
        %v3230 = vpop.f32.mrb[0].mxu0
        %v3231 = vadd.f32 %v3008, %v3230
        %v3232 = vpop.f32.mrb[0].mxu0
        %v3233 = vpop.f32.mrb[0].mxu0
        %v3234 = vadd.f32 %v3008, %v3233
        %v3235 = vpop.f32.mrb[0].mxu0
        %3236 = vdwg.mxu0
        %v3237 = vmax.f32 %v3111, 0.0
        %v3238 = vmax.f32 %v3114, 0.0
        %v3239 = vmax.f32 %v3119, 0.0
        %v3240 = vmax.f32 %v3122, 0.0
        %v3241 = vmax.f32 %v3127, 0.0
        %v3242 = vmax.f32 %v3130, 0.0
        %v3243 = vmax.f32 %v3135, 0.0
        %v3244 = vmax.f32 %v3138, 0.0
        %v3245 = vmax.f32 %v3143, 0.0
        %v3246 = vmax.f32 %v3146, 0.0
        %v3247 = vmax.f32 %v3151, 0.0
        %v3248 = vmax.f32 %v3154, 0.0
        %v3249 = vmax.f32 %v3159, 0.0
        %v3250 = vmax.f32 %v3162, 0.0
        %v3251 = vmax.f32 %v3167, 0.0
        %v3252 = vmax.f32 %v3170, 0.0
        %v3253 = vmax.f32 %v3175, 0.0
        %v3254 = vmax.f32 %v3178, 0.0
        %v3255 = vmax.f32 %v3183, 0.0
        %v3256 = vmax.f32 %v3186, 0.0
        %v3257 = vmax.f32 %v3191, 0.0
        %v3258 = vmax.f32 %v3194, 0.0
        %v3259 = vmax.f32 %v3199, 0.0
        %v3260 = vmax.f32 %v3202, 0.0
        %v3261 = vmax.f32 %v3207, 0.0
        %v3262 = vmax.f32 %v3210, 0.0
        %v3263 = vmax.f32 %v3215, 0.0
        %v3264 = vmax.f32 %v3218, 0.0
        %v3265 = vmax.f32 %v3223, 0.0
        %v3266 = vmax.f32 %v3226, 0.0
        %v3267 = vmax.f32 %v3231, 0.0
        %v3268 = vmax.f32 %v3234, 0.0
        %3269 = vst [vmem:[%s217] sm:$0xff] %v3237
        %3270 = vst [vmem:[%s217 + $0x8] sm:$0xff] %v3238
        %3271 = vst [vmem:[%s217 + $0x10] sm:$0xff] %v3239
        %3272 = vst [vmem:[%s217 + $0x18] sm:$0xff] %v3240
        %3273 = vst [vmem:[%s217 + $0x20] sm:$0xff] %v3241
        %3274 = vst [vmem:[%s217 + $0x28] sm:$0xff] %v3242
        %3275 = vst [vmem:[%s217 + $0x30] sm:$0xff] %v3243
        %3276 = vst [vmem:[%s217 + $0x38] sm:$0xff] %v3244
        %3277 = vst [vmem:[%s217 + $0x40] sm:$0xff] %v3245
        %3278 = vst [vmem:[%s217 + $0x48] sm:$0xff] %v3246
        %3279 = vst [vmem:[%s217 + $0x50] sm:$0xff] %v3247
        %3280 = vst [vmem:[%s217 + $0x58] sm:$0xff] %v3248
        %3281 = vst [vmem:[%s217 + $0x60] sm:$0xff] %v3249
        %3282 = vst [vmem:[%s217 + $0x68] sm:$0xff] %v3250
        %3283 = vst [vmem:[%s217 + $0x70] sm:$0xff] %v3251
        %3284 = vst [vmem:[%s217 + $0x78] sm:$0xff] %v3252
        %3285 = vst [vmem:[%s217 + $0x80] sm:$0xff] %v3253
        %3286 = vst [vmem:[%s217 + $0x88] sm:$0xff] %v3254
        %3287 = vst [vmem:[%s217 + $0x90] sm:$0xff] %v3255
        %3288 = vst [vmem:[%s217 + $0x98] sm:$0xff] %v3256
        %3289 = vst [vmem:[%s217 + $0xa0] sm:$0xff] %v3257
        %3290 = vst [vmem:[%s217 + $0xa8] sm:$0xff] %v3258
        %3291 = vst [vmem:[%s217 + $0xb0] sm:$0xff] %v3259
        %3292 = vst [vmem:[%s217 + $0xb8] sm:$0xff] %v3260
        %3293 = vst [vmem:[%s217 + $0xc0] sm:$0xff] %v3261
        %3294 = vst [vmem:[%s217 + $0xc8] sm:$0xff] %v3262
        %3295 = vst [vmem:[%s217 + $0xd0] sm:$0xff] %v3263
        %3296 = vst [vmem:[%s217 + $0xd8] sm:$0xff] %v3264
        %3297 = vst [vmem:[%s217 + $0xe0] sm:$0xff] %v3265
        %3298 = vst [vmem:[%s217 + $0xe8] sm:$0xff] %v3266
        %3299 = vst [vmem:[%s217 + $0xf0] sm:$0xff] %v3267
        %3300 = vst [vmem:[%s217 + $0xf8] sm:$0xff] %v3268
        %s3301 = sand.u32 %s137, 1
        %s3302 = scalar_lea.sflag [#allocation3], %s3301
        %s3303 = sand.u32 %s137, 1
        %s3304 = smul.addr %s3303, 256
        %s3305 = scalar_lea.vmem [#allocation2], %s3304
        // Predicated region
        $region41: #{tpu_custom_call.1} parent=39 // pred_check
          %p3306 = pneg %p147
        $region42: #{tpu_custom_call.1} parent=39 // pred_check_branch
          %3308 = sbr.rel (%p3306) target = $region44
        $region43: #{tpu_custom_call.1} parent=39 // pred_region
          %s3310 = ssub.s32 4096, 4096
          %3311 = vsyncadd %s3302, %s3310
          %s3312 = smul.addr %s19, 32
          %s3313 = smul.addr %s3312, 128
          %s3314 = scalar_lea.hbm %s5, %s3313
          %s3315 = sshll.u32 %s3305, 4
          %s3316 = int_to_ptr.vmem [resolvable:$true] %s3315
          %3321 = dma.vmem_to_hbm [thread:$0]  %s3316, 4096, %s3314, %s3302, 128, 128, 8
        $region44: #{tpu_custom_call.1} parent=39 // pred_fallthru
          _
      $region40: #{tpu_custom_call.1} parent=5 // pred_fallthru
        _
      %p3322 = scmp.le.s32.totalorder 2, %s14
      // Predicated region
      $region45: #{tpu_custom_call.1} parent=5 // pred_check
        %p3323 = pneg %p3322
      $region46: #{tpu_custom_call.1} parent=5 // pred_check_branch
        %3325 = sbr.rel (%p3323) target = $region48
      $region47: #{tpu_custom_call.1} parent=5 // pred_region
        %s3326 = ssub.s32 %s14, 2
        // Predicated region
        $region49: #{tpu_custom_call.1} parent=47 // pred_check
          %p3327 = pneg %p153
        $region50: #{tpu_custom_call.1} parent=47 // pred_check_branch
          %3329 = sbr.rel (%p3327) target = $region52
        $region51: #{tpu_custom_call.1} parent=47 // pred_region
          %s3330 = sand.u32 %s138, 1
          %s3331 = scalar_lea.sflag [#allocation3], %s3330
          %s3332 = sand.u32 %s138, 1
          %s3333 = smul.addr %s3332, 256
          %s3334 = scalar_lea.vmem [#allocation2], %s3333
          %3335 = dma.done %s3331, 4096
        $region52: #{tpu_custom_call.1} parent=47 // pred_fallthru
          _
      $region48: #{tpu_custom_call.1} parent=5 // pred_fallthru
        _
    $region6: #{tpu_custom_call.1} parent=1 // loop_footer
      %s18 = sadd.s32 1, %s14
    $region7: #{tpu_custom_call.1} parent=1 // loop_footer_branch
      %13 = sbr.rel target = $region3
    $region8: #{tpu_custom_call.1} parent=1 // loop_exit
      _
    %3336 = vsyncpa [#allocation3], 1
    %s3337 = scalar_lea.sflag [#allocation3], 1
    %3338 = vsyncpa %s3337, 1

</llo_original>
